<compile_context>
chip_gen: v7x
topology: tpu7x:2x2x1
jax: 0.10.0
libtpu: 0.0.40
codegen_flags: <defaults>
</compile_context>

<pallas_src>
import jax
import jax.numpy as jnp
from jax.experimental import pallas as pl
from jax.experimental.pallas import tpu as pltpu


_LAYER_DIMS = [(900, 180), (180, 180), (180, 180), (180, 180), (180, 180), (180, 120)]
_K_IN = 900     # layer-1 contraction (streamed unpadded)
_N_PAD = 128    # output features padded so the final store is lane-dense
_SUB = 16       # bf16 sublane packing -> keep batch tiles a multiple of 16


def _round_up(n, m):
    return (n + m - 1) // m * m


def _mlp_kernel(*refs):
    """refs = (x_ref, w1, b1, ..., w6, b6, o_ref).

    x: (TB, 900) bf16 tile.  Weights: (in, out) bf16, resident in VMEM.
    Biases: (1, out) f32.  Output: (TB, N_PAD) f32 tile.
    """
    x_ref, o_ref = refs[0], refs[-1]
    wb = refs[1:-1]
    n_layers = len(wb) // 2

    h = x_ref[...]                                       # bf16 MXU operand
    for l in range(n_layers):
        w_ref = wb[2 * l]
        b_ref = wb[2 * l + 1]
        # bf16 x bf16 -> f32 accumulation; bias add in f32.
        z = jnp.dot(h, w_ref[...], preferred_element_type=jnp.float32) + b_ref[...]
        if l < n_layers - 1:
            # tanh in f32 (v5e-safe), cast back to bf16 for the next matmul.
            # TODO(synk): on v6e/v7x a bf16 tanh (bf16 EUP) is a small extra win.
            h = jnp.tanh(z).astype(jnp.bfloat16)
        else:
            o_ref[...] = z.astype(o_ref.dtype)


def prepare_params(params):
    """Pack (W(in,out) f32, b(out,) f32) pairs into the kernel layout.

    Returns a flat list [w1, b1, ..., w6, b6] with:
      * w6 zero-padded to (180, N_PAD) (b6 zero-padded to N_PAD),
      * all weights cast to bf16,
      * biases kept f32, reshaped to (1, out).
    """
    flat = []
    n = len(params)
    for i, (w, b) in enumerate(params):
        w = w.astype(jnp.float32)
        b = b.astype(jnp.float32)
        if i == n - 1:
            w = jnp.pad(w, ((0, 0), (0, _N_PAD - w.shape[1])))
            b = jnp.pad(b, (0, _N_PAD - b.shape[0]))
        flat.append(w.astype(jnp.bfloat16))
        flat.append(b.reshape(1, -1))
    return flat


def net_branch_forward(x, flat_params, *, tile_b=1024):
    """x: (B, 900) float32.  flat_params: output of prepare_params()."""
    B, K = x.shape
    assert K == _K_IN, (B, K)
    out_dim = _LAYER_DIMS[-1][1]

    # ---- batch tile selection -------------------------------------------
    # Pick the number of tiles first, then size tb to cover B with minimal
    # padding (multiple of 16 for bf16 sublane packing).  If everything would
    # fit one tile but there is enough work, split into two tiles so the
    # "parallel" grid axis spans both TensorCores on v7x.
    num_tiles = max(1, -(-B // tile_b))
    if num_tiles == 1 and B >= 2 * _SUB:
        num_tiles = 2
    tb = _round_up(-(-B // num_tiles), _SUB)
    bp = num_tiles * tb

    # x streamed as bf16, batch-padded only (K left at 900 -> no wasted bytes).
    xp = jnp.pad(x.astype(jnp.bfloat16), ((0, bp - B), (0, 0)))

    grid = (num_tiles,)

    in_specs = [pl.BlockSpec((tb, _K_IN), lambda i: (i, 0))]       # batch-tiled x
    for a in flat_params:
        # Weights/biases: constant index_map -> DMA'd once, resident in VMEM.
        in_specs.append(pl.BlockSpec(a.shape, lambda i: (0, 0)))

    flops = 2 * bp * sum(di * do for di, do in _LAYER_DIMS)
    transcendentals = bp * sum(do for _, do in _LAYER_DIMS[:-1])
    bytes_accessed = int(
        xp.size * xp.dtype.itemsize
        + sum(int(a.size) * a.dtype.itemsize for a in flat_params)
        + bp * _N_PAD * 4
    )

    out = pl.pallas_call(
        _mlp_kernel,
        out_shape=jax.ShapeDtypeStruct((bp, _N_PAD), jnp.float32),
        grid_spec=pltpu.PrefetchScalarGridSpec(
            num_scalar_prefetch=0,
            grid=grid,
            in_specs=in_specs,
            out_specs=pl.BlockSpec((tb, _N_PAD), lambda i: (i, 0)),
        ),
        compiler_params=pltpu.CompilerParams(
            dimension_semantics=("parallel",),   # v7x: shard batch tiles over 2 TCs
            vmem_limit_bytes=32 << 20,
        ),
        cost_estimate=pl.CostEstimate(
            flops=flops,
            transcendentals=transcendentals,
            bytes_accessed=bytes_accessed,
        ),
    )(xp, *flat_params)

    return out[:B, :out_dim]


def init_params(key):
    """Deterministic init matching nn.Linear shapes (weights stored transposed)."""
    params = []
    for (d_in, d_out) in _LAYER_DIMS:
        key, wk = jax.random.split(key)
        # modest scale so tanh stays in its non-saturated range
        w = jax.random.normal(wk, (d_in, d_out), dtype=jnp.float32) * 0.05
        b = jnp.zeros((d_out,), dtype=jnp.float32)
        params.append((w, b))
    return params


def reference_forward(x, params):
    h = x
    for i, (w, b) in enumerate(params):
        h = h @ w + b
        if i < len(params) - 1:
            h = jnp.tanh(h)
    return h


if __name__ == "__main__":
    key = jax.random.PRNGKey(0)
    key, xk = jax.random.split(key)

    B = 8
    x = jax.random.normal(xk, (B, 900), dtype=jnp.float32)

    params = init_params(key)
    flat_params = prepare_params(params)

    out = net_branch_forward(x, flat_params)
    out = jax.block_until_ready(out)

    ref = reference_forward(x, params)
    assert out.shape == (B, 120), out.shape
    # bf16 matmul operands with f32 accumulation -> ~1e-2-level agreement.
    max_err = float(jnp.max(jnp.abs(out - ref)))
    assert max_err < 5e-2, max_err

    print("KERNEL_OK")
</pallas_src>

<mosaic_0001>
module attributes {stable_mosaic.version = 11 : i64} {
  func.func @_mlp_kernel(%arg0: i32, %arg1: memref<16x900xbf16, #tpu.memory_space<vmem>>, %arg2: memref<900x180xbf16, #tpu.memory_space<vmem>>, %arg3: memref<1x180xf32, #tpu.memory_space<vmem>>, %arg4: memref<180x180xbf16, #tpu.memory_space<vmem>>, %arg5: memref<1x180xf32, #tpu.memory_space<vmem>>, %arg6: memref<180x180xbf16, #tpu.memory_space<vmem>>, %arg7: memref<1x180xf32, #tpu.memory_space<vmem>>, %arg8: memref<180x180xbf16, #tpu.memory_space<vmem>>, %arg9: memref<1x180xf32, #tpu.memory_space<vmem>>, %arg10: memref<180x180xbf16, #tpu.memory_space<vmem>>, %arg11: memref<1x180xf32, #tpu.memory_space<vmem>>, %arg12: memref<180x128xbf16, #tpu.memory_space<vmem>>, %arg13: memref<1x128xf32, #tpu.memory_space<vmem>>, %arg14: memref<16x128xf32, #tpu.memory_space<vmem>>) attributes {dimension_semantics = [#tpu.dimension_semantics<parallel>], iteration_bounds = array<i64: 1>, scalar_prefetch = 0 : i64, scratch_operands = 0 : i64, tpu.core_type = #tpu.core_type<tc>, window_params = [{transform_indices = @transform_0, window_bounds = array<i64: 16, 900>}, {pipeline_mode = #tpu.pipeline_mode<synchronous>, transform_indices = @transform_1, window_bounds = array<i64: 900, 180>}, {pipeline_mode = #tpu.pipeline_mode<synchronous>, transform_indices = @transform_2, window_bounds = array<i64: 1, 180>}, {pipeline_mode = #tpu.pipeline_mode<synchronous>, transform_indices = @transform_3, window_bounds = array<i64: 180, 180>}, {pipeline_mode = #tpu.pipeline_mode<synchronous>, transform_indices = @transform_4, window_bounds = array<i64: 1, 180>}, {pipeline_mode = #tpu.pipeline_mode<synchronous>, transform_indices = @transform_5, window_bounds = array<i64: 180, 180>}, {pipeline_mode = #tpu.pipeline_mode<synchronous>, transform_indices = @transform_6, window_bounds = array<i64: 1, 180>}, {pipeline_mode = #tpu.pipeline_mode<synchronous>, transform_indices = @transform_7, window_bounds = array<i64: 180, 180>}, {pipeline_mode = #tpu.pipeline_mode<synchronous>, transform_indices = @transform_8, window_bounds = array<i64: 1, 180>}, {pipeline_mode = #tpu.pipeline_mode<synchronous>, transform_indices = @transform_9, window_bounds = array<i64: 180, 180>}, {pipeline_mode = #tpu.pipeline_mode<synchronous>, transform_indices = @transform_10, window_bounds = array<i64: 1, 180>}, {pipeline_mode = #tpu.pipeline_mode<synchronous>, transform_indices = @transform_11, window_bounds = array<i64: 180, 128>}, {pipeline_mode = #tpu.pipeline_mode<synchronous>, transform_indices = @transform_12, window_bounds = array<i64: 1, 128>}, {transform_indices = @transform_13, window_bounds = array<i64: 16, 128>}]} {
    %c0 = arith.constant 0 : index
    %c0_0 = arith.constant 0 : index
    %0 = vector.load %arg1[%c0, %c0_0] : memref<16x900xbf16, #tpu.memory_space<vmem>>, vector<16x900xbf16>
    %c0_1 = arith.constant 0 : index
    %c0_2 = arith.constant 0 : index
    %1 = vector.load %arg2[%c0_1, %c0_2] : memref<900x180xbf16, #tpu.memory_space<vmem>>, vector<900x180xbf16>
    %cst = arith.constant dense<0.000000e+00> : vector<16x180xf32>
    %2 = tpu.matmul %0, %1, %cst {dimension_numbers = #tpu.dot_dimension_numbers<[1], [0], [0], [1], [0, 0, 1, 1], [], []>} : vector<16x900xbf16>, vector<900x180xbf16>, vector<16x180xf32> -> vector<16x180xf32>
    %c0_3 = arith.constant 0 : index
    %c0_4 = arith.constant 0 : index
    %3 = vector.load %arg3[%c0_3, %c0_4] : memref<1x180xf32, #tpu.memory_space<vmem>>, vector<1x180xf32>
    %4 = vector.broadcast %3 : vector<1x180xf32> to vector<16x180xf32>
    %5 = arith.addf %2, %4 : vector<16x180xf32>
    %6 = math.tanh %5 : vector<16x180xf32>
    %7 = arith.truncf %6 : vector<16x180xf32> to vector<16x180xbf16>
    %c0_5 = arith.constant 0 : index
    %c0_6 = arith.constant 0 : index
    %8 = vector.load %arg4[%c0_5, %c0_6] : memref<180x180xbf16, #tpu.memory_space<vmem>>, vector<180x180xbf16>
    %cst_7 = arith.constant dense<0.000000e+00> : vector<16x180xf32>
    %9 = tpu.matmul %7, %8, %cst_7 {dimension_numbers = #tpu.dot_dimension_numbers<[1], [0], [0], [1], [0, 0, 1, 1], [], []>} : vector<16x180xbf16>, vector<180x180xbf16>, vector<16x180xf32> -> vector<16x180xf32>
    %c0_8 = arith.constant 0 : index
    %c0_9 = arith.constant 0 : index
    %10 = vector.load %arg5[%c0_8, %c0_9] : memref<1x180xf32, #tpu.memory_space<vmem>>, vector<1x180xf32>
    %11 = vector.broadcast %10 : vector<1x180xf32> to vector<16x180xf32>
    %12 = arith.addf %9, %11 : vector<16x180xf32>
    %13 = math.tanh %12 : vector<16x180xf32>
    %14 = arith.truncf %13 : vector<16x180xf32> to vector<16x180xbf16>
    %c0_10 = arith.constant 0 : index
    %c0_11 = arith.constant 0 : index
    %15 = vector.load %arg6[%c0_10, %c0_11] : memref<180x180xbf16, #tpu.memory_space<vmem>>, vector<180x180xbf16>
    %cst_12 = arith.constant dense<0.000000e+00> : vector<16x180xf32>
    %16 = tpu.matmul %14, %15, %cst_12 {dimension_numbers = #tpu.dot_dimension_numbers<[1], [0], [0], [1], [0, 0, 1, 1], [], []>} : vector<16x180xbf16>, vector<180x180xbf16>, vector<16x180xf32> -> vector<16x180xf32>
    %c0_13 = arith.constant 0 : index
    %c0_14 = arith.constant 0 : index
    %17 = vector.load %arg7[%c0_13, %c0_14] : memref<1x180xf32, #tpu.memory_space<vmem>>, vector<1x180xf32>
    %18 = vector.broadcast %17 : vector<1x180xf32> to vector<16x180xf32>
    %19 = arith.addf %16, %18 : vector<16x180xf32>
    %20 = math.tanh %19 : vector<16x180xf32>
    %21 = arith.truncf %20 : vector<16x180xf32> to vector<16x180xbf16>
    %c0_15 = arith.constant 0 : index
    %c0_16 = arith.constant 0 : index
    %22 = vector.load %arg8[%c0_15, %c0_16] : memref<180x180xbf16, #tpu.memory_space<vmem>>, vector<180x180xbf16>
    %cst_17 = arith.constant dense<0.000000e+00> : vector<16x180xf32>
    %23 = tpu.matmul %21, %22, %cst_17 {dimension_numbers = #tpu.dot_dimension_numbers<[1], [0], [0], [1], [0, 0, 1, 1], [], []>} : vector<16x180xbf16>, vector<180x180xbf16>, vector<16x180xf32> -> vector<16x180xf32>
    %c0_18 = arith.constant 0 : index
    %c0_19 = arith.constant 0 : index
    %24 = vector.load %arg9[%c0_18, %c0_19] : memref<1x180xf32, #tpu.memory_space<vmem>>, vector<1x180xf32>
    %25 = vector.broadcast %24 : vector<1x180xf32> to vector<16x180xf32>
    %26 = arith.addf %23, %25 : vector<16x180xf32>
    %27 = math.tanh %26 : vector<16x180xf32>
    %28 = arith.truncf %27 : vector<16x180xf32> to vector<16x180xbf16>
    %c0_20 = arith.constant 0 : index
    %c0_21 = arith.constant 0 : index
    %29 = vector.load %arg10[%c0_20, %c0_21] : memref<180x180xbf16, #tpu.memory_space<vmem>>, vector<180x180xbf16>
    %cst_22 = arith.constant dense<0.000000e+00> : vector<16x180xf32>
    %30 = tpu.matmul %28, %29, %cst_22 {dimension_numbers = #tpu.dot_dimension_numbers<[1], [0], [0], [1], [0, 0, 1, 1], [], []>} : vector<16x180xbf16>, vector<180x180xbf16>, vector<16x180xf32> -> vector<16x180xf32>
    %c0_23 = arith.constant 0 : index
    %c0_24 = arith.constant 0 : index
    %31 = vector.load %arg11[%c0_23, %c0_24] : memref<1x180xf32, #tpu.memory_space<vmem>>, vector<1x180xf32>
    %32 = vector.broadcast %31 : vector<1x180xf32> to vector<16x180xf32>
    %33 = arith.addf %30, %32 : vector<16x180xf32>
    %34 = math.tanh %33 : vector<16x180xf32>
    %35 = arith.truncf %34 : vector<16x180xf32> to vector<16x180xbf16>
    %c0_25 = arith.constant 0 : index
    %c0_26 = arith.constant 0 : index
    %36 = vector.load %arg12[%c0_25, %c0_26] : memref<180x128xbf16, #tpu.memory_space<vmem>>, vector<180x128xbf16>
    %cst_27 = arith.constant dense<0.000000e+00> : vector<16x128xf32>
    %37 = tpu.matmul %35, %36, %cst_27 {dimension_numbers = #tpu.dot_dimension_numbers<[1], [0], [0], [1], [0, 0, 1, 1], [], []>} : vector<16x180xbf16>, vector<180x128xbf16>, vector<16x128xf32> -> vector<16x128xf32>
    %c0_28 = arith.constant 0 : index
    %c0_29 = arith.constant 0 : index
    %38 = vector.load %arg13[%c0_28, %c0_29] : memref<1x128xf32, #tpu.memory_space<vmem>>, vector<1x128xf32>
    %39 = vector.broadcast %38 : vector<1x128xf32> to vector<16x128xf32>
    %40 = arith.addf %37, %39 : vector<16x128xf32>
    %c0_30 = arith.constant 0 : index
    %c0_31 = arith.constant 0 : index
    %41 = vector.load %arg14[%c0_30, %c0_31] : memref<16x128xf32, #tpu.memory_space<vmem>>, vector<16x128xf32>
    tpu.vector_store %arg14[%c0_30, %c0_31], %40 {strides = array<i32>} : memref<16x128xf32, #tpu.memory_space<vmem>>, vector<16x128xf32>,
    return
  }
  func.func @transform_0(%arg0: i32) -> (i32, i32) {
    %c0_i32 = arith.constant 0 : i32
    %c0_i32_0 = arith.constant 0 : i32
    return %arg0, %c0_i32 : i32, i32
  }
  func.func @transform_1(%arg0: i32) -> (i32, i32) {
    %c0_i32 = arith.constant 0 : i32
    %c0_i32_0 = arith.constant 0 : i32
    %c0_i32_1 = arith.constant 0 : i32
    return %c0_i32, %c0_i32_0 : i32, i32
  }
  func.func @transform_2(%arg0: i32) -> (i32, i32) {
    %c0_i32 = arith.constant 0 : i32
    %c0_i32_0 = arith.constant 0 : i32
    %c0_i32_1 = arith.constant 0 : i32
    return %c0_i32, %c0_i32_0 : i32, i32
  }
  func.func @transform_3(%arg0: i32) -> (i32, i32) {
    %c0_i32 = arith.constant 0 : i32
    %c0_i32_0 = arith.constant 0 : i32
    %c0_i32_1 = arith.constant 0 : i32
    return %c0_i32, %c0_i32_0 : i32, i32
  }
  func.func @transform_4(%arg0: i32) -> (i32, i32) {
    %c0_i32 = arith.constant 0 : i32
    %c0_i32_0 = arith.constant 0 : i32
    %c0_i32_1 = arith.constant 0 : i32
    return %c0_i32, %c0_i32_0 : i32, i32
  }
  func.func @transform_5(%arg0: i32) -> (i32, i32) {
    %c0_i32 = arith.constant 0 : i32
    %c0_i32_0 = arith.constant 0 : i32
    %c0_i32_1 = arith.constant 0 : i32
    return %c0_i32, %c0_i32_0 : i32, i32
  }
  func.func @transform_6(%arg0: i32) -> (i32, i32) {
    %c0_i32 = arith.constant 0 : i32
    %c0_i32_0 = arith.constant 0 : i32
    %c0_i32_1 = arith.constant 0 : i32
    return %c0_i32, %c0_i32_0 : i32, i32
  }
  func.func @transform_7(%arg0: i32) -> (i32, i32) {
    %c0_i32 = arith.constant 0 : i32
    %c0_i32_0 = arith.constant 0 : i32
    %c0_i32_1 = arith.constant 0 : i32
    return %c0_i32, %c0_i32_0 : i32, i32
  }
  func.func @transform_8(%arg0: i32) -> (i32, i32) {
    %c0_i32 = arith.constant 0 : i32
    %c0_i32_0 = arith.constant 0 : i32
    %c0_i32_1 = arith.constant 0 : i32
    return %c0_i32, %c0_i32_0 : i32, i32
  }
  func.func @transform_9(%arg0: i32) -> (i32, i32) {
    %c0_i32 = arith.constant 0 : i32
    %c0_i32_0 = arith.constant 0 : i32
    %c0_i32_1 = arith.constant 0 : i32
    return %c0_i32, %c0_i32_0 : i32, i32
  }
  func.func @transform_10(%arg0: i32) -> (i32, i32) {
    %c0_i32 = arith.constant 0 : i32
    %c0_i32_0 = arith.constant 0 : i32
    %c0_i32_1 = arith.constant 0 : i32
    return %c0_i32, %c0_i32_0 : i32, i32
  }
  func.func @transform_11(%arg0: i32) -> (i32, i32) {
    %c0_i32 = arith.constant 0 : i32
    %c0_i32_0 = arith.constant 0 : i32
    %c0_i32_1 = arith.constant 0 : i32
    return %c0_i32, %c0_i32_0 : i32, i32
  }
  func.func @transform_12(%arg0: i32) -> (i32, i32) {
    %c0_i32 = arith.constant 0 : i32
    %c0_i32_0 = arith.constant 0 : i32
    %c0_i32_1 = arith.constant 0 : i32
    return %c0_i32, %c0_i32_0 : i32, i32
  }
  func.func @transform_13(%arg0: i32) -> (i32, i32) {
    %c0_i32 = arith.constant 0 : i32
    %c0_i32_0 = arith.constant 0 : i32
    return %arg0, %c0_i32 : i32, i32
  }
}

</mosaic_0001>

<llo_original>
// kernel: tpu_custom_call.1
$region0: #{tpu_custom_call.1}
  #allocation0 [shape = 'u32[]', space=smem, size = 0x4, offset = 0x4, fixed_abs, tag = 'smem constant byte address 0x4 - core index']
  #allocation1 [shape = 'u32[144,128]{1,0:T(1,128)}', space=vmem, size = 0x12000, scoped, tag = 'internal scratch']
  %s0 = inlined_call_operand.vmem [shape: bf16[16,900], index: 0, kind: input, shape index: {}]
  %s1 = inlined_call_operand.vmem [shape: bf16[900,180], index: 1, kind: input, shape index: {}]
  %s2 = inlined_call_operand.vmem [shape: f32[1,180], index: 2, kind: input, shape index: {}]
  %s3 = inlined_call_operand.vmem [shape: bf16[180,180], index: 3, kind: input, shape index: {}]
  %s4 = inlined_call_operand.vmem [shape: f32[1,180], index: 4, kind: input, shape index: {}]
  %s5 = inlined_call_operand.vmem [shape: bf16[180,180], index: 5, kind: input, shape index: {}]
  %s6 = inlined_call_operand.vmem [shape: f32[1,180], index: 6, kind: input, shape index: {}]
  %s7 = inlined_call_operand.vmem [shape: bf16[180,180], index: 7, kind: input, shape index: {}]
  %s8 = inlined_call_operand.vmem [shape: f32[1,180], index: 8, kind: input, shape index: {}]
  %s9 = inlined_call_operand.vmem [shape: bf16[180,180], index: 9, kind: input, shape index: {}]
  %s10 = inlined_call_operand.vmem [shape: f32[1,180], index: 10, kind: input, shape index: {}]
  %s11 = inlined_call_operand.vmem [shape: bf16[180,128], index: 11, kind: input, shape index: {}]
  %s12 = inlined_call_operand.vmem [shape: f32[1,128], index: 12, kind: input, shape index: {}]
  %s13 = inlined_call_operand.hbm [shape: f32[16,128], index: 13, kind: output, shape index: {}]
  %s14 = sld [smem:[#allocation0]]
  $region62: #{tpu_custom_call.1} parent=0
    _
  %s16 = ssub.s32 1, %s14
  %s17 = scalar_select 0, %s16, %s14
  $region1: #{tpu_custom_call.1} parent=0
    #allocation2 [shape = 'u8[8192]{0}', space=vmem, size = 0x2000, scoped, tag = 'output window, operand 0, single buffered']
    #allocation3 [shape = 's32[1]{0}', space=sflag, size = 0x4, scoped, tag = 'scoped memory for tpu_custom_call.1']
    %18 = vsyncpa [#allocation3], 0
    // Predicated region
    $region2: #{tpu_custom_call.1} parent=1 // pred_check
      _
    $region3: #{tpu_custom_call.1} parent=1 // pred_check_branch
      %20 = sbr.rel (0) target = $region5
    $region4: #{tpu_custom_call.1} parent=1 // pred_region
      _
    $region5: #{tpu_custom_call.1} parent=1 // pred_fallthru
      _
    // Predicated region
    $region6: #{tpu_custom_call.1} parent=1 // pred_check
      _
    $region7: #{tpu_custom_call.1} parent=1 // pred_check_branch
      %22 = sbr.rel (0) target = $region9
    $region8: #{tpu_custom_call.1} parent=1 // pred_region
      _
    $region9: #{tpu_custom_call.1} parent=1 // pred_fallthru
      _
    // Predicated region
    $region10: #{tpu_custom_call.1} parent=1 // pred_check
      _
    $region11: #{tpu_custom_call.1} parent=1 // pred_check_branch
      %24 = sbr.rel (0) target = $region13
    $region12: #{tpu_custom_call.1} parent=1 // pred_region
      _
    $region13: #{tpu_custom_call.1} parent=1 // pred_fallthru
      _
    // Predicated region
    $region14: #{tpu_custom_call.1} parent=1 // pred_check
      _
    $region15: #{tpu_custom_call.1} parent=1 // pred_check_branch
      %26 = sbr.rel (0) target = $region17
    $region16: #{tpu_custom_call.1} parent=1 // pred_region
      _
    $region17: #{tpu_custom_call.1} parent=1 // pred_fallthru
      _
    // Predicated region
    $region18: #{tpu_custom_call.1} parent=1 // pred_check
      _
    $region19: #{tpu_custom_call.1} parent=1 // pred_check_branch
      %28 = sbr.rel (0) target = $region21
    $region20: #{tpu_custom_call.1} parent=1 // pred_region
      _
    $region21: #{tpu_custom_call.1} parent=1 // pred_fallthru
      _
    // Predicated region
    $region22: #{tpu_custom_call.1} parent=1 // pred_check
      _
    $region23: #{tpu_custom_call.1} parent=1 // pred_check_branch
      %30 = sbr.rel (0) target = $region25
    $region24: #{tpu_custom_call.1} parent=1 // pred_region
      _
    $region25: #{tpu_custom_call.1} parent=1 // pred_fallthru
      _
    // Predicated region
    $region26: #{tpu_custom_call.1} parent=1 // pred_check
      _
    $region27: #{tpu_custom_call.1} parent=1 // pred_check_branch
      %32 = sbr.rel (0) target = $region29
    $region28: #{tpu_custom_call.1} parent=1 // pred_region
      _
    $region29: #{tpu_custom_call.1} parent=1 // pred_fallthru
      _
    // Predicated region
    $region30: #{tpu_custom_call.1} parent=1 // pred_check
      _
    $region31: #{tpu_custom_call.1} parent=1 // pred_check_branch
      %34 = sbr.rel (0) target = $region33
    $region32: #{tpu_custom_call.1} parent=1 // pred_region
      _
    $region33: #{tpu_custom_call.1} parent=1 // pred_fallthru
      _
    // Predicated region
    $region34: #{tpu_custom_call.1} parent=1 // pred_check
      _
    $region35: #{tpu_custom_call.1} parent=1 // pred_check_branch
      %36 = sbr.rel (0) target = $region37
    $region36: #{tpu_custom_call.1} parent=1 // pred_region
      _
    $region37: #{tpu_custom_call.1} parent=1 // pred_fallthru
      _
    // Predicated region
    $region38: #{tpu_custom_call.1} parent=1 // pred_check
      _
    $region39: #{tpu_custom_call.1} parent=1 // pred_check_branch
      %38 = sbr.rel (0) target = $region41
    $region40: #{tpu_custom_call.1} parent=1 // pred_region
      _
    $region41: #{tpu_custom_call.1} parent=1 // pred_fallthru
      _
    // Predicated region
    $region42: #{tpu_custom_call.1} parent=1 // pred_check
      _
    $region43: #{tpu_custom_call.1} parent=1 // pred_check_branch
      %40 = sbr.rel (0) target = $region45
    $region44: #{tpu_custom_call.1} parent=1 // pred_region
      _
    $region45: #{tpu_custom_call.1} parent=1 // pred_fallthru
      _
    // Predicated region
    $region46: #{tpu_custom_call.1} parent=1 // pred_check
      _
    $region47: #{tpu_custom_call.1} parent=1 // pred_check_branch
      %42 = sbr.rel (0) target = $region49
    $region48: #{tpu_custom_call.1} parent=1 // pred_region
      _
    $region49: #{tpu_custom_call.1} parent=1 // pred_fallthru
      _
    // Predicated region
    $region50: #{tpu_custom_call.1} parent=1 // pred_check
      _
    $region51: #{tpu_custom_call.1} parent=1 // pred_check_branch
      %44 = sbr.rel (0) target = $region53
    $region52: #{tpu_custom_call.1} parent=1 // pred_region
      _
    $region53: #{tpu_custom_call.1} parent=1 // pred_fallthru
      _
    %v46 = vld [vmem:[%s0] sm:$0xff]
    %v47 = vld [vmem:[%s0 + $0x8] sm:$0xff]
    %v48 = vld [vmem:[%s0 + $0x10] sm:$0xff]
    %v49 = vld [vmem:[%s0 + $0x18] sm:$0xff]
    %v50 = vld [vmem:[%s0 + $0x20] sm:$0xff]
    %v51 = vld [vmem:[%s0 + $0x28] sm:$0xff]
    %v52 = vld [vmem:[%s0 + $0x30] sm:$0xff]
    %v53 = vld [vmem:[%s0 + $0x38] sm:$0xff]
    %v54 = vld [vmem:[%s1] sm:$0xff]
    %v55 = vld [vmem:[%s1 + $0x8] sm:$0xff]
    %v56 = vld [vmem:[%s1 + $0x10] sm:$0xff]
    %v57 = vld [vmem:[%s1 + $0x18] sm:$0xff]
    %v58 = vld [vmem:[%s1 + $0x20] sm:$0xff]
    %v59 = vld [vmem:[%s1 + $0x28] sm:$0xff]
    %v60 = vld [vmem:[%s1 + $0x30] sm:$0xff]
    %v61 = vld [vmem:[%s1 + $0x38] sm:$0xff]
    %v62 = vld [vmem:[%s1 + $0x40] sm:$0xff]
    %v63 = vld [vmem:[%s1 + $0x48] sm:$0xff]
    %v64 = vld [vmem:[%s1 + $0x50] sm:$0xff]
    %v65 = vld [vmem:[%s1 + $0x58] sm:$0xff]
    %v66 = vld [vmem:[%s1 + $0x60] sm:$0xff]
    %v67 = vld [vmem:[%s1 + $0x68] sm:$0xff]
    %v68 = vld [vmem:[%s1 + $0x70] sm:$0xff]
    %v69 = vld [vmem:[%s1 + $0x78] sm:$0xff]
    %v70 = vld [vmem:[%s1 + $0x80] sm:$0xff]
    %v71 = vld [vmem:[%s1 + $0x88] sm:$0xff]
    %v72 = vld [vmem:[%s1 + $0x90] sm:$0xff]
    %v73 = vld [vmem:[%s1 + $0x98] sm:$0xff]
    %v74 = vld [vmem:[%s1 + $0xa0] sm:$0xff]
    %v75 = vld [vmem:[%s1 + $0xa8] sm:$0xff]
    %v76 = vld [vmem:[%s1 + $0xb0] sm:$0xff]
    %v77 = vld [vmem:[%s1 + $0xb8] sm:$0xff]
    %v78 = vld [vmem:[%s1 + $0xc0] sm:$0xff]
    %v79 = vld [vmem:[%s1 + $0xc8] sm:$0xff]
    %v80 = vld [vmem:[%s1 + $0xd0] sm:$0xff]
    %v81 = vld [vmem:[%s1 + $0xd8] sm:$0xff]
    %v82 = vld [vmem:[%s1 + $0xe0] sm:$0xff]
    %v83 = vld [vmem:[%s1 + $0xe8] sm:$0xff]
    %v84 = vld [vmem:[%s1 + $0xf0] sm:$0xff]
    %v85 = vld [vmem:[%s1 + $0xf8] sm:$0xff]
    %v86 = vld [vmem:[%s1 + $0x100] sm:$0xff]
    %v87 = vld [vmem:[%s1 + $0x108] sm:$0xff]
    %v88 = vld [vmem:[%s1 + $0x110] sm:$0xff]
    %v89 = vld [vmem:[%s1 + $0x118] sm:$0xff]
    %v90 = vld [vmem:[%s1 + $0x120] sm:$0xff]
    %v91 = vld [vmem:[%s1 + $0x128] sm:$0xff]
    %v92 = vld [vmem:[%s1 + $0x130] sm:$0xff]
    %v93 = vld [vmem:[%s1 + $0x138] sm:$0xff]
    %v94 = vld [vmem:[%s1 + $0x140] sm:$0xff]
    %v95 = vld [vmem:[%s1 + $0x148] sm:$0xff]
    %v96 = vld [vmem:[%s1 + $0x150] sm:$0xff]
    %v97 = vld [vmem:[%s1 + $0x158] sm:$0xff]
    %v98 = vld [vmem:[%s1 + $0x160] sm:$0xff]
    %v99 = vld [vmem:[%s1 + $0x168] sm:$0xff]
    %v100 = vld [vmem:[%s1 + $0x170] sm:$0xff]
    %v101 = vld [vmem:[%s1 + $0x178] sm:$0xff]
    %v102 = vld [vmem:[%s1 + $0x180] sm:$0xff]
    %v103 = vld [vmem:[%s1 + $0x188] sm:$0xff]
    %v104 = vld [vmem:[%s1 + $0x190] sm:$0xff]
    %v105 = vld [vmem:[%s1 + $0x198] sm:$0xff]
    %v106 = vld [vmem:[%s1 + $0x1a0] sm:$0xff]
    %v107 = vld [vmem:[%s1 + $0x1a8] sm:$0xff]
    %v108 = vld [vmem:[%s1 + $0x1b0] sm:$0xff]
    %v109 = vld [vmem:[%s1 + $0x1b8] sm:$0xff]
    %v110 = vld [vmem:[%s1 + $0x1c0] sm:$0xff]
    %v111 = vld [vmem:[%s1 + $0x1c8] sm:$0xff]
    %v112 = vld [vmem:[%s1 + $0x1d0] sm:$0xff]
    %v113 = vld [vmem:[%s1 + $0x1d8] sm:$0xff]
    %v114 = vld [vmem:[%s1 + $0x1e0] sm:$0xff]
    %v115 = vld [vmem:[%s1 + $0x1e8] sm:$0xff]
    %v116 = vld [vmem:[%s1 + $0x1f0] sm:$0xff]
    %v117 = vld [vmem:[%s1 + $0x1f8] sm:$0xff]
    %v118 = vld [vmem:[%s1 + $0x200] sm:$0xff]
    %v119 = vld [vmem:[%s1 + $0x208] sm:$0xff]
    %v120 = vld [vmem:[%s1 + $0x210] sm:$0xff]
    %v121 = vld [vmem:[%s1 + $0x218] sm:$0xff]
    %v122 = vld [vmem:[%s1 + $0x220] sm:$0xff]
    %v123 = vld [vmem:[%s1 + $0x228] sm:$0xff]
    %v124 = vld [vmem:[%s1 + $0x230] sm:$0xff]
    %v125 = vld [vmem:[%s1 + $0x238] sm:$0xff]
    %v126 = vld [vmem:[%s1 + $0x240] sm:$0xff]
    %v127 = vld [vmem:[%s1 + $0x248] sm:$0xff]
    %v128 = vld [vmem:[%s1 + $0x250] sm:$0xff]
    %v129 = vld [vmem:[%s1 + $0x258] sm:$0xff]
    %v130 = vld [vmem:[%s1 + $0x260] sm:$0xff]
    %v131 = vld [vmem:[%s1 + $0x268] sm:$0xff]
    %v132 = vld [vmem:[%s1 + $0x270] sm:$0xff]
    %v133 = vld [vmem:[%s1 + $0x278] sm:$0xff]
    %v134 = vld [vmem:[%s1 + $0x280] sm:$0xff]
    %v135 = vld [vmem:[%s1 + $0x288] sm:$0xff]
    %v136 = vld [vmem:[%s1 + $0x290] sm:$0xff]
    %v137 = vld [vmem:[%s1 + $0x298] sm:$0xff]
    %v138 = vld [vmem:[%s1 + $0x2a0] sm:$0xff]
    %v139 = vld [vmem:[%s1 + $0x2a8] sm:$0xff]
    %v140 = vld [vmem:[%s1 + $0x2b0] sm:$0xff]
    %v141 = vld [vmem:[%s1 + $0x2b8] sm:$0xff]
    %v142 = vld [vmem:[%s1 + $0x2c0] sm:$0xff]
    %v143 = vld [vmem:[%s1 + $0x2c8] sm:$0xff]
    %v144 = vld [vmem:[%s1 + $0x2d0] sm:$0xff]
    %v145 = vld [vmem:[%s1 + $0x2d8] sm:$0xff]
    %v146 = vld [vmem:[%s1 + $0x2e0] sm:$0xff]
    %v147 = vld [vmem:[%s1 + $0x2e8] sm:$0xff]
    %v148 = vld [vmem:[%s1 + $0x2f0] sm:$0xff]
    %v149 = vld [vmem:[%s1 + $0x2f8] sm:$0xff]
    %v150 = vld [vmem:[%s1 + $0x300] sm:$0xff]
    %v151 = vld [vmem:[%s1 + $0x308] sm:$0xff]
    %v152 = vld [vmem:[%s1 + $0x310] sm:$0xff]
    %v153 = vld [vmem:[%s1 + $0x318] sm:$0xff]
    %v154 = vld [vmem:[%s1 + $0x320] sm:$0xff]
    %v155 = vld [vmem:[%s1 + $0x328] sm:$0xff]
    %v156 = vld [vmem:[%s1 + $0x330] sm:$0xff]
    %v157 = vld [vmem:[%s1 + $0x338] sm:$0xff]
    %v158 = vld [vmem:[%s1 + $0x340] sm:$0xff]
    %v159 = vld [vmem:[%s1 + $0x348] sm:$0xff]
    %v160 = vld [vmem:[%s1 + $0x350] sm:$0xff]
    %v161 = vld [vmem:[%s1 + $0x358] sm:$0xff]
    %v162 = vld [vmem:[%s1 + $0x360] sm:$0xff]
    %v163 = vld [vmem:[%s1 + $0x368] sm:$0xff]
    %v164 = vld [vmem:[%s1 + $0x370] sm:$0xff]
    %v165 = vld [vmem:[%s1 + $0x378] sm:$0xff]
    %v166 = vld [vmem:[%s1 + $0x380] sm:$0x33]
    %v167 = vld [vmem:[%s2] sm:$0x3]
    %v169 = vlaneseq
    %v170 = vshrl.u32 %v169, 7
    %v171 = vsub.s32 0, %v170
    %v172 = vrot.slane %v167, %v171
    %v173 = vlaneseq
    %v174 = vshrl.u32 %v173, 7
    %v175 = vsub.s32 1, %v174
    %v176 = vrot.slane %v167, %v175
    %v187 = vunpack.c.l.b16 %v46
    %v188 = vunpack.c.h.b16 %v46
    %v189 = vunpack.c.l.b16 %v47
    %v190 = vunpack.c.h.b16 %v47
    %v191 = vunpack.c.l.b16 %v48
    %v192 = vunpack.c.h.b16 %v48
    %v193 = vunpack.c.l.b16 %v49
    %v194 = vunpack.c.h.b16 %v49
    %v195 = vunpack.c.l.b16 %v50
    %v196 = vunpack.c.h.b16 %v50
    %v197 = vunpack.c.l.b16 %v51
    %v198 = vunpack.c.h.b16 %v51
    %v199 = vunpack.c.l.b16 %v52
    %v200 = vunpack.c.h.b16 %v52
    %v201 = vunpack.c.l.b16 %v53
    %v202 = vunpack.c.h.b16 %v53
    %v203 = vpack.c.b16 %v195, %v187
    %v204 = vpack.c.b16 %v196, %v188
    %v205 = vpack.c.b16 %v197, %v189
    %v206 = vpack.c.b16 %v198, %v190
    %v207 = vpack.c.b16 %v199, %v191
    %v208 = vpack.c.b16 %v200, %v192
    %v209 = vpack.c.b16 %v201, %v193
    %v210 = vpack.c.b16 %v202, %v194
    %v331 = vunpack.c.l.b16 %v54
    %v332 = vunpack.c.h.b16 %v54
    %v333 = vunpack.c.l.b16 %v55
    %v334 = vunpack.c.h.b16 %v55
    %v335 = vunpack.c.l.b16 %v56
    %v336 = vunpack.c.h.b16 %v56
    %v337 = vunpack.c.l.b16 %v57
    %v338 = vunpack.c.h.b16 %v57
    %v339 = vunpack.c.l.b16 %v58
    %v340 = vunpack.c.h.b16 %v58
    %v341 = vunpack.c.l.b16 %v59
    %v342 = vunpack.c.h.b16 %v59
    %v343 = vunpack.c.l.b16 %v60
    %v344 = vunpack.c.h.b16 %v60
    %v345 = vunpack.c.l.b16 %v61
    %v346 = vunpack.c.h.b16 %v61
    %v347 = vunpack.c.l.b16 %v62
    %v348 = vunpack.c.h.b16 %v62
    %v349 = vunpack.c.l.b16 %v63
    %v350 = vunpack.c.h.b16 %v63
    %v351 = vunpack.c.l.b16 %v64
    %v352 = vunpack.c.h.b16 %v64
    %v353 = vunpack.c.l.b16 %v65
    %v354 = vunpack.c.h.b16 %v65
    %v355 = vunpack.c.l.b16 %v66
    %v356 = vunpack.c.h.b16 %v66
    %v357 = vunpack.c.l.b16 %v67
    %v358 = vunpack.c.h.b16 %v67
    %v359 = vunpack.c.l.b16 %v68
    %v360 = vunpack.c.h.b16 %v68
    %v361 = vunpack.c.l.b16 %v69
    %v362 = vunpack.c.h.b16 %v69
    %v363 = vunpack.c.l.b16 %v70
    %v364 = vunpack.c.h.b16 %v70
    %v365 = vunpack.c.l.b16 %v71
    %v366 = vunpack.c.h.b16 %v71
    %v367 = vunpack.c.l.b16 %v72
    %v368 = vunpack.c.h.b16 %v72
    %v369 = vunpack.c.l.b16 %v73
    %v370 = vunpack.c.h.b16 %v73
    %v371 = vunpack.c.l.b16 %v74
    %v372 = vunpack.c.h.b16 %v74
    %v373 = vunpack.c.l.b16 %v75
    %v374 = vunpack.c.h.b16 %v75
    %v375 = vunpack.c.l.b16 %v76
    %v376 = vunpack.c.h.b16 %v76
    %v377 = vunpack.c.l.b16 %v77
    %v378 = vunpack.c.h.b16 %v77
    %v379 = vunpack.c.l.b16 %v78
    %v380 = vunpack.c.h.b16 %v78
    %v381 = vunpack.c.l.b16 %v79
    %v382 = vunpack.c.h.b16 %v79
    %v383 = vunpack.c.l.b16 %v80
    %v384 = vunpack.c.h.b16 %v80
    %v385 = vunpack.c.l.b16 %v81
    %v386 = vunpack.c.h.b16 %v81
    %v387 = vunpack.c.l.b16 %v82
    %v388 = vunpack.c.h.b16 %v82
    %v389 = vunpack.c.l.b16 %v83
    %v390 = vunpack.c.h.b16 %v83
    %v391 = vunpack.c.l.b16 %v84
    %v392 = vunpack.c.h.b16 %v84
    %v393 = vunpack.c.l.b16 %v85
    %v394 = vunpack.c.h.b16 %v85
    %v395 = vunpack.c.l.b16 %v86
    %v396 = vunpack.c.h.b16 %v86
    %v397 = vunpack.c.l.b16 %v87
    %v398 = vunpack.c.h.b16 %v87
    %v399 = vunpack.c.l.b16 %v88
    %v400 = vunpack.c.h.b16 %v88
    %v401 = vunpack.c.l.b16 %v89
    %v402 = vunpack.c.h.b16 %v89
    %v403 = vunpack.c.l.b16 %v90
    %v404 = vunpack.c.h.b16 %v90
    %v405 = vunpack.c.l.b16 %v91
    %v406 = vunpack.c.h.b16 %v91
    %v407 = vunpack.c.l.b16 %v92
    %v408 = vunpack.c.h.b16 %v92
    %v409 = vunpack.c.l.b16 %v93
    %v410 = vunpack.c.h.b16 %v93
    %v411 = vunpack.c.l.b16 %v94
    %v412 = vunpack.c.h.b16 %v94
    %v413 = vunpack.c.l.b16 %v95
    %v414 = vunpack.c.h.b16 %v95
    %v415 = vunpack.c.l.b16 %v96
    %v416 = vunpack.c.h.b16 %v96
    %v417 = vunpack.c.l.b16 %v97
    %v418 = vunpack.c.h.b16 %v97
    %v419 = vunpack.c.l.b16 %v98
    %v420 = vunpack.c.h.b16 %v98
    %v421 = vunpack.c.l.b16 %v99
    %v422 = vunpack.c.h.b16 %v99
    %v423 = vunpack.c.l.b16 %v100
    %v424 = vunpack.c.h.b16 %v100
    %v425 = vunpack.c.l.b16 %v101
    %v426 = vunpack.c.h.b16 %v101
    %v427 = vunpack.c.l.b16 %v102
    %v428 = vunpack.c.h.b16 %v102
    %v429 = vunpack.c.l.b16 %v103
    %v430 = vunpack.c.h.b16 %v103
    %v431 = vunpack.c.l.b16 %v104
    %v432 = vunpack.c.h.b16 %v104
    %v433 = vunpack.c.l.b16 %v105
    %v434 = vunpack.c.h.b16 %v105
    %v435 = vunpack.c.l.b16 %v106
    %v436 = vunpack.c.h.b16 %v106
    %v437 = vunpack.c.l.b16 %v107
    %v438 = vunpack.c.h.b16 %v107
    %v439 = vunpack.c.l.b16 %v108
    %v440 = vunpack.c.h.b16 %v108
    %v441 = vunpack.c.l.b16 %v109
    %v442 = vunpack.c.h.b16 %v109
    %v443 = vunpack.c.l.b16 %v110
    %v444 = vunpack.c.h.b16 %v110
    %v445 = vunpack.c.l.b16 %v111
    %v446 = vunpack.c.h.b16 %v111
    %v447 = vunpack.c.l.b16 %v112
    %v448 = vunpack.c.h.b16 %v112
    %v449 = vunpack.c.l.b16 %v113
    %v450 = vunpack.c.h.b16 %v113
    %v451 = vunpack.c.l.b16 %v114
    %v452 = vunpack.c.h.b16 %v114
    %v453 = vunpack.c.l.b16 %v115
    %v454 = vunpack.c.h.b16 %v115
    %v455 = vunpack.c.l.b16 %v116
    %v456 = vunpack.c.h.b16 %v116
    %v457 = vunpack.c.l.b16 %v117
    %v458 = vunpack.c.h.b16 %v117
    %v459 = vunpack.c.l.b16 %v118
    %v460 = vunpack.c.h.b16 %v118
    %v461 = vunpack.c.l.b16 %v119
    %v462 = vunpack.c.h.b16 %v119
    %v463 = vunpack.c.l.b16 %v120
    %v464 = vunpack.c.h.b16 %v120
    %v465 = vunpack.c.l.b16 %v121
    %v466 = vunpack.c.h.b16 %v121
    %v467 = vunpack.c.l.b16 %v122
    %v468 = vunpack.c.h.b16 %v122
    %v469 = vunpack.c.l.b16 %v123
    %v470 = vunpack.c.h.b16 %v123
    %v471 = vunpack.c.l.b16 %v124
    %v472 = vunpack.c.h.b16 %v124
    %v473 = vunpack.c.l.b16 %v125
    %v474 = vunpack.c.h.b16 %v125
    %v475 = vunpack.c.l.b16 %v126
    %v476 = vunpack.c.h.b16 %v126
    %v477 = vunpack.c.l.b16 %v127
    %v478 = vunpack.c.h.b16 %v127
    %v479 = vunpack.c.l.b16 %v128
    %v480 = vunpack.c.h.b16 %v128
    %v481 = vunpack.c.l.b16 %v129
    %v482 = vunpack.c.h.b16 %v129
    %v483 = vunpack.c.l.b16 %v130
    %v484 = vunpack.c.h.b16 %v130
    %v485 = vunpack.c.l.b16 %v131
    %v486 = vunpack.c.h.b16 %v131
    %v487 = vunpack.c.l.b16 %v132
    %v488 = vunpack.c.h.b16 %v132
    %v489 = vunpack.c.l.b16 %v133
    %v490 = vunpack.c.h.b16 %v133
    %v491 = vunpack.c.l.b16 %v134
    %v492 = vunpack.c.h.b16 %v134
    %v493 = vunpack.c.l.b16 %v135
    %v494 = vunpack.c.h.b16 %v135
    %v495 = vunpack.c.l.b16 %v136
    %v496 = vunpack.c.h.b16 %v136
    %v497 = vunpack.c.l.b16 %v137
    %v498 = vunpack.c.h.b16 %v137
    %v499 = vunpack.c.l.b16 %v138
    %v500 = vunpack.c.h.b16 %v138
    %v501 = vunpack.c.l.b16 %v139
    %v502 = vunpack.c.h.b16 %v139
    %v503 = vunpack.c.l.b16 %v140
    %v504 = vunpack.c.h.b16 %v140
    %v505 = vunpack.c.l.b16 %v141
    %v506 = vunpack.c.h.b16 %v141
    %v507 = vunpack.c.l.b16 %v142
    %v508 = vunpack.c.h.b16 %v142
    %v509 = vunpack.c.l.b16 %v143
    %v510 = vunpack.c.h.b16 %v143
    %v511 = vunpack.c.l.b16 %v144
    %v512 = vunpack.c.h.b16 %v144
    %v513 = vunpack.c.l.b16 %v145
    %v514 = vunpack.c.h.b16 %v145
    %v515 = vunpack.c.l.b16 %v146
    %v516 = vunpack.c.h.b16 %v146
    %v517 = vunpack.c.l.b16 %v147
    %v518 = vunpack.c.h.b16 %v147
    %v519 = vunpack.c.l.b16 %v148
    %v520 = vunpack.c.h.b16 %v148
    %v521 = vunpack.c.l.b16 %v149
    %v522 = vunpack.c.h.b16 %v149
    %v523 = vunpack.c.l.b16 %v150
    %v524 = vunpack.c.h.b16 %v150
    %v525 = vunpack.c.l.b16 %v151
    %v526 = vunpack.c.h.b16 %v151
    %v527 = vunpack.c.l.b16 %v152
    %v528 = vunpack.c.h.b16 %v152
    %v529 = vunpack.c.l.b16 %v153
    %v530 = vunpack.c.h.b16 %v153
    %v531 = vunpack.c.l.b16 %v154
    %v532 = vunpack.c.h.b16 %v154
    %v533 = vunpack.c.l.b16 %v155
    %v534 = vunpack.c.h.b16 %v155
    %v535 = vunpack.c.l.b16 %v156
    %v536 = vunpack.c.h.b16 %v156
    %v537 = vunpack.c.l.b16 %v157
    %v538 = vunpack.c.h.b16 %v157
    %v539 = vunpack.c.l.b16 %v158
    %v540 = vunpack.c.h.b16 %v158
    %v541 = vunpack.c.l.b16 %v159
    %v542 = vunpack.c.h.b16 %v159
    %v543 = vunpack.c.l.b16 %v160
    %v544 = vunpack.c.h.b16 %v160
    %v545 = vunpack.c.l.b16 %v161
    %v546 = vunpack.c.h.b16 %v161
    %v547 = vunpack.c.l.b16 %v162
    %v548 = vunpack.c.h.b16 %v162
    %v549 = vunpack.c.l.b16 %v163
    %v550 = vunpack.c.h.b16 %v163
    %v551 = vunpack.c.l.b16 %v164
    %v552 = vunpack.c.h.b16 %v164
    %v553 = vunpack.c.l.b16 %v165
    %v554 = vunpack.c.h.b16 %v165
    %v555 = vunpack.c.l.b16 %v166
    %v556 = vunpack.c.h.b16 %v166
    %v557 = vpack.c.b16 %v333, %v331
    %v558 = vpack.c.b16 %v334, %v332
    %v559 = vpack.c.b16 %v337, %v335
    %v560 = vpack.c.b16 %v338, %v336
    %v561 = vpack.c.b16 %v341, %v339
    %v562 = vpack.c.b16 %v342, %v340
    %v563 = vpack.c.b16 %v345, %v343
    %v564 = vpack.c.b16 %v346, %v344
    %v565 = vpack.c.b16 %v349, %v347
    %v566 = vpack.c.b16 %v350, %v348
    %v567 = vpack.c.b16 %v353, %v351
    %v568 = vpack.c.b16 %v354, %v352
    %v569 = vpack.c.b16 %v357, %v355
    %v570 = vpack.c.b16 %v358, %v356
    %v571 = vpack.c.b16 %v361, %v359
    %v572 = vpack.c.b16 %v362, %v360
    %v573 = vpack.c.b16 %v365, %v363
    %v574 = vpack.c.b16 %v366, %v364
    %v575 = vpack.c.b16 %v369, %v367
    %v576 = vpack.c.b16 %v370, %v368
    %v577 = vpack.c.b16 %v373, %v371
    %v578 = vpack.c.b16 %v374, %v372
    %v579 = vpack.c.b16 %v377, %v375
    %v580 = vpack.c.b16 %v378, %v376
    %v581 = vpack.c.b16 %v381, %v379
    %v582 = vpack.c.b16 %v382, %v380
    %v583 = vpack.c.b16 %v385, %v383
    %v584 = vpack.c.b16 %v386, %v384
    %v585 = vpack.c.b16 %v389, %v387
    %v586 = vpack.c.b16 %v390, %v388
    %v587 = vpack.c.b16 %v393, %v391
    %v588 = vpack.c.b16 %v394, %v392
    %v589 = vpack.c.b16 %v397, %v395
    %v590 = vpack.c.b16 %v398, %v396
    %v591 = vpack.c.b16 %v401, %v399
    %v592 = vpack.c.b16 %v402, %v400
    %v593 = vpack.c.b16 %v405, %v403
    %v594 = vpack.c.b16 %v406, %v404
    %v595 = vpack.c.b16 %v409, %v407
    %v596 = vpack.c.b16 %v410, %v408
    %v597 = vpack.c.b16 %v413, %v411
    %v598 = vpack.c.b16 %v414, %v412
    %v599 = vpack.c.b16 %v417, %v415
    %v600 = vpack.c.b16 %v418, %v416
    %v601 = vpack.c.b16 %v421, %v419
    %v602 = vpack.c.b16 %v422, %v420
    %v603 = vpack.c.b16 %v425, %v423
    %v604 = vpack.c.b16 %v426, %v424
    %v605 = vpack.c.b16 %v429, %v427
    %v606 = vpack.c.b16 %v430, %v428
    %v607 = vpack.c.b16 %v433, %v431
    %v608 = vpack.c.b16 %v434, %v432
    %v609 = vpack.c.b16 %v437, %v435
    %v610 = vpack.c.b16 %v438, %v436
    %v611 = vpack.c.b16 %v441, %v439
    %v612 = vpack.c.b16 %v442, %v440
    %v613 = vpack.c.b16 %v445, %v443
    %v614 = vpack.c.b16 %v446, %v444
    %v615 = vpack.c.b16 %v449, %v447
    %v616 = vpack.c.b16 %v450, %v448
    %v617 = vpack.c.b16 %v453, %v451
    %v618 = vpack.c.b16 %v454, %v452
    %v619 = vpack.c.b16 %v457, %v455
    %v620 = vpack.c.b16 %v458, %v456
    %v621 = vpack.c.b16 %v461, %v459
    %v622 = vpack.c.b16 %v462, %v460
    %v623 = vpack.c.b16 %v465, %v463
    %v624 = vpack.c.b16 %v466, %v464
    %v625 = vpack.c.b16 %v469, %v467
    %v626 = vpack.c.b16 %v470, %v468
    %v627 = vpack.c.b16 %v473, %v471
    %v628 = vpack.c.b16 %v474, %v472
    %v629 = vpack.c.b16 %v477, %v475
    %v630 = vpack.c.b16 %v478, %v476
    %v631 = vpack.c.b16 %v481, %v479
    %v632 = vpack.c.b16 %v482, %v480
    %v633 = vpack.c.b16 %v485, %v483
    %v634 = vpack.c.b16 %v486, %v484
    %v635 = vpack.c.b16 %v489, %v487
    %v636 = vpack.c.b16 %v490, %v488
    %v637 = vpack.c.b16 %v493, %v491
    %v638 = vpack.c.b16 %v494, %v492
    %v639 = vpack.c.b16 %v497, %v495
    %v640 = vpack.c.b16 %v498, %v496
    %v641 = vpack.c.b16 %v501, %v499
    %v642 = vpack.c.b16 %v502, %v500
    %v643 = vpack.c.b16 %v505, %v503
    %v644 = vpack.c.b16 %v506, %v504
    %v645 = vpack.c.b16 %v509, %v507
    %v646 = vpack.c.b16 %v510, %v508
    %v647 = vpack.c.b16 %v513, %v511
    %v648 = vpack.c.b16 %v514, %v512
    %v649 = vpack.c.b16 %v517, %v515
    %v650 = vpack.c.b16 %v518, %v516
    %v651 = vpack.c.b16 %v521, %v519
    %v652 = vpack.c.b16 %v522, %v520
    %v653 = vpack.c.b16 %v525, %v523
    %v654 = vpack.c.b16 %v526, %v524
    %v655 = vpack.c.b16 %v529, %v527
    %v656 = vpack.c.b16 %v530, %v528
    %v657 = vpack.c.b16 %v533, %v531
    %v658 = vpack.c.b16 %v534, %v532
    %v659 = vpack.c.b16 %v537, %v535
    %v660 = vpack.c.b16 %v538, %v536
    %v661 = vpack.c.b16 %v541, %v539
    %v662 = vpack.c.b16 %v542, %v540
    %v663 = vpack.c.b16 %v545, %v543
    %v664 = vpack.c.b16 %v546, %v544
    %v665 = vpack.c.b16 %v549, %v547
    %v666 = vpack.c.b16 %v550, %v548
    %v667 = vpack.c.b16 %v553, %v551
    %v668 = vpack.c.b16 %v554, %v552
    %v669 = vpack.c.b16 %v555, %v555
    %v670 = vpack.c.b16 %v556, %v556
    %vm783 = vcmask 31744
    %v785 = vsel %vm783, %v210, 0
    %vm787 = vcmask 1041408
    %v789 = vsel %vm787, %v669, 0
    %v792 = vsel %vm787, %v670, 0
    %794 = vmatprep.subr.bf16.mxu0 %v558
    %795 = vmatpush1.bf16.msra.mxu0 %v557
    %796 = vmatprep.subr.bf16.mxu0 %v560
    %797 = vmatpush1.bf16.msra.mxu0 %v559
    %798 = vmatprep.subr.bf16.mxu0 %v562
    %799 = vmatpush1.bf16.msra.mxu0 %v561
    %800 = vmatprep.subr.bf16.mxu0 %v564
    %801 = vmatpush1.bf16.msra.mxu0 %v563
    %802 = vmatprep.subr.bf16.mxu0 %v566
    %803 = vmatpush1.bf16.msra.mxu0 %v565
    %804 = vmatprep.subr.bf16.mxu0 %v568
    %805 = vmatpush1.bf16.msra.mxu0 %v567
    %806 = vmatprep.subr.bf16.mxu0 %v570
    %807 = vmatpush1.bf16.msra.mxu0 %v569
    %808 = vmatprep.subr.bf16.mxu0 %v572
    %809 = vmatpush1.bf16.msra.mxu0 %v571
    %810 = vmatprep.subr.bf16.mxu0 %v574
    %811 = vmatpush1.bf16.msra.mxu0 %v573
    %812 = vmatprep.subr.bf16.mxu0 %v576
    %813 = vmatpush1.bf16.msra.mxu0 %v575
    %814 = vmatprep.subr.bf16.mxu0 %v578
    %815 = vmatpush1.bf16.msra.mxu0 %v577
    %816 = vmatprep.subr.bf16.mxu0 %v580
    %817 = vmatpush1.bf16.msra.mxu0 %v579
    %818 = vmatprep.subr.bf16.mxu0 %v582
    %819 = vmatpush1.bf16.msra.mxu0 %v581
    %820 = vmatprep.subr.bf16.mxu0 %v584
    %821 = vmatpush1.bf16.msra.mxu0 %v583
    %822 = vmatprep.subr.bf16.mxu0 %v586
    %823 = vmatpush1.bf16.msra.mxu0 %v585
    %824 = vmatprep.subr.bf16.mxu0 %v588
    %825 = vmatpush1.bf16.msra.mxu0 %v587
    %826 = vmatprep.mubr.bf16.mxu0 %v204
    %827 = vmatmul.mubr.bf16.gmra.mrb[0].mxu0 %v203
    %v828 = vpop.f32.mrb[0].mxu0
    %v829 = vadd.f32 %v172, %v828
    %v830 = vpop.f32.mrb[0].mxu0
    %v831 = vadd.f32 %v176, %v830
    %v832 = vpop.f32.mrb[0].mxu0
    %v833 = vadd.f32 %v172, %v832
    %v834 = vpop.f32.mrb[0].mxu0
    %v835 = vadd.f32 %v176, %v834
    %836 = vdwg.mxu0
    %837 = vmatprep.subr.bf16.mxu0 %v590
    %838 = vmatpush1.bf16.msra.mxu0 %v589
    %839 = vmatprep.subr.bf16.mxu0 %v592
    %840 = vmatpush1.bf16.msra.mxu0 %v591
    %841 = vmatprep.subr.bf16.mxu0 %v594
    %842 = vmatpush1.bf16.msra.mxu0 %v593
    %843 = vmatprep.subr.bf16.mxu0 %v596
    %844 = vmatpush1.bf16.msra.mxu0 %v595
    %845 = vmatprep.subr.bf16.mxu0 %v598
    %846 = vmatpush1.bf16.msra.mxu0 %v597
    %847 = vmatprep.subr.bf16.mxu0 %v600
    %848 = vmatpush1.bf16.msra.mxu0 %v599
    %849 = vmatprep.subr.bf16.mxu0 %v602
    %850 = vmatpush1.bf16.msra.mxu0 %v601
    %851 = vmatprep.subr.bf16.mxu0 %v604
    %852 = vmatpush1.bf16.msra.mxu0 %v603
    %853 = vmatprep.subr.bf16.mxu0 %v606
    %854 = vmatpush1.bf16.msra.mxu0 %v605
    %855 = vmatprep.subr.bf16.mxu0 %v608
    %856 = vmatpush1.bf16.msra.mxu0 %v607
    %857 = vmatprep.subr.bf16.mxu0 %v610
    %858 = vmatpush1.bf16.msra.mxu0 %v609
    %859 = vmatprep.subr.bf16.mxu0 %v612
    %860 = vmatpush1.bf16.msra.mxu0 %v611
    %861 = vmatprep.subr.bf16.mxu0 %v614
    %862 = vmatpush1.bf16.msra.mxu0 %v613
    %863 = vmatprep.subr.bf16.mxu0 %v616
    %864 = vmatpush1.bf16.msra.mxu0 %v615
    %865 = vmatprep.subr.bf16.mxu0 %v618
    %866 = vmatpush1.bf16.msra.mxu0 %v617
    %867 = vmatprep.subr.bf16.mxu0 %v620
    %868 = vmatpush1.bf16.msra.mxu0 %v619
    %869 = vmatprep.mubr.bf16.mxu0 %v206
    %870 = vmatmul.mubr.bf16.gmra.mrb[0].mxu0 %v205
    %v871 = vpop.f32.mrb[0].mxu0
    %v872 = vadd.f32 %v829, %v871
    %v873 = vpop.f32.mrb[0].mxu0
    %v874 = vadd.f32 %v831, %v873
    %v875 = vpop.f32.mrb[0].mxu0
    %v876 = vadd.f32 %v833, %v875
    %v877 = vpop.f32.mrb[0].mxu0
    %v878 = vadd.f32 %v835, %v877
    %879 = vdwg.mxu0
    %880 = vmatprep.subr.bf16.mxu0 %v622
    %881 = vmatpush1.bf16.msra.mxu0 %v621
    %882 = vmatprep.subr.bf16.mxu0 %v624
    %883 = vmatpush1.bf16.msra.mxu0 %v623
    %884 = vmatprep.subr.bf16.mxu0 %v626
    %885 = vmatpush1.bf16.msra.mxu0 %v625
    %886 = vmatprep.subr.bf16.mxu0 %v628
    %887 = vmatpush1.bf16.msra.mxu0 %v627
    %888 = vmatprep.subr.bf16.mxu0 %v630
    %889 = vmatpush1.bf16.msra.mxu0 %v629
    %890 = vmatprep.subr.bf16.mxu0 %v632
    %891 = vmatpush1.bf16.msra.mxu0 %v631
    %892 = vmatprep.subr.bf16.mxu0 %v634
    %893 = vmatpush1.bf16.msra.mxu0 %v633
    %894 = vmatprep.subr.bf16.mxu0 %v636
    %895 = vmatpush1.bf16.msra.mxu0 %v635
    %896 = vmatprep.subr.bf16.mxu0 %v638
    %897 = vmatpush1.bf16.msra.mxu0 %v637
    %898 = vmatprep.subr.bf16.mxu0 %v640
    %899 = vmatpush1.bf16.msra.mxu0 %v639
    %900 = vmatprep.subr.bf16.mxu0 %v642
    %901 = vmatpush1.bf16.msra.mxu0 %v641
    %902 = vmatprep.subr.bf16.mxu0 %v644
    %903 = vmatpush1.bf16.msra.mxu0 %v643
    %904 = vmatprep.subr.bf16.mxu0 %v646
    %905 = vmatpush1.bf16.msra.mxu0 %v645
    %906 = vmatprep.subr.bf16.mxu0 %v648
    %907 = vmatpush1.bf16.msra.mxu0 %v647
    %908 = vmatprep.subr.bf16.mxu0 %v650
    %909 = vmatpush1.bf16.msra.mxu0 %v649
    %910 = vmatprep.subr.bf16.mxu0 %v652
    %911 = vmatpush1.bf16.msra.mxu0 %v651
    %912 = vmatprep.mubr.bf16.mxu0 %v208
    %913 = vmatmul.mubr.bf16.gmra.mrb[0].mxu0 %v207
    %v914 = vpop.f32.mrb[0].mxu0
    %v915 = vadd.f32 %v872, %v914
    %v916 = vpop.f32.mrb[0].mxu0
    %v917 = vadd.f32 %v874, %v916
    %v918 = vpop.f32.mrb[0].mxu0
    %v919 = vadd.f32 %v876, %v918
    %v920 = vpop.f32.mrb[0].mxu0
    %v921 = vadd.f32 %v878, %v920
    %922 = vdwg.mxu0
    %923 = vmatprep.subr.bf16.mxu0 %v654
    %924 = vmatpush1.bf16.msra.mxu0 %v653
    %925 = vmatprep.subr.bf16.mxu0 %v656
    %926 = vmatpush1.bf16.msra.mxu0 %v655
    %927 = vmatprep.subr.bf16.mxu0 %v658
    %928 = vmatpush1.bf16.msra.mxu0 %v657
    %929 = vmatprep.subr.bf16.mxu0 %v660
    %930 = vmatpush1.bf16.msra.mxu0 %v659
    %931 = vmatprep.subr.bf16.mxu0 %v662
    %932 = vmatpush1.bf16.msra.mxu0 %v661
    %933 = vmatprep.subr.bf16.mxu0 %v664
    %934 = vmatpush1.bf16.msra.mxu0 %v663
    %935 = vmatprep.subr.bf16.mxu0 %v666
    %936 = vmatpush1.bf16.msra.mxu0 %v665
    %937 = vmatprep.subr.bf16.mxu0 %v668
    %938 = vmatpush1.bf16.msra.mxu0 %v667
    %939 = vmatprep.subr.bf16.mxu0 %v792
    %940 = vmatpush1.bf16.msra.mxu0 %v789
    %941 = vmatprep.subr.bf16.mxu0 0
    %942 = vmatpush1.bf16.msra.mxu0 0
    %943 = vmatprep.subr.bf16.mxu0 0
    %944 = vmatpush1.bf16.msra.mxu0 0
    %945 = vmatprep.subr.bf16.mxu0 0
    %946 = vmatpush1.bf16.msra.mxu0 0
    %947 = vmatprep.subr.bf16.mxu0 0
    %948 = vmatpush1.bf16.msra.mxu0 0
    %949 = vmatprep.subr.bf16.mxu0 0
    %950 = vmatpush1.bf16.msra.mxu0 0
    %951 = vmatprep.subr.bf16.mxu0 0
    %952 = vmatpush1.bf16.msra.mxu0 0
    %953 = vmatprep.subr.bf16.mxu0 0
    %954 = vmatpush1.bf16.msra.mxu0 0
    %955 = vmatprep.mubr.bf16.mxu0 %v785
    %956 = vmatmul.mubr.bf16.gmra.mrb[0].mxu0 %v209
    %v957 = vpop.f32.mrb[0].mxu0
    %v958 = vadd.f32 %v915, %v957
    %v959 = vpop.f32.mrb[0].mxu0
    %v960 = vadd.f32 %v917, %v959
    %v961 = vpop.f32.mrb[0].mxu0
    %v962 = vadd.f32 %v919, %v961
    %v963 = vpop.f32.mrb[0].mxu0
    %v964 = vadd.f32 %v921, %v963
    %965 = vdwg.mxu0
    %v966 = vtanh.pop %v958
    %v967 = vtanh.pop %v960
    %v968 = vtanh.pop %v962
    %v969 = vtanh.pop %v964
    %v970 = vpack.c.bf16 %v968, %v966
    %v971 = vpack.c.bf16 %v969, %v967
    %v972 = vld [vmem:[%s3] sm:$0xff]
    %v973 = vld [vmem:[%s3 + $0x8] sm:$0xff]
    %v974 = vld [vmem:[%s3 + $0x10] sm:$0xff]
    %v975 = vld [vmem:[%s3 + $0x18] sm:$0xff]
    %v976 = vld [vmem:[%s3 + $0x20] sm:$0xff]
    %v977 = vld [vmem:[%s3 + $0x28] sm:$0xff]
    %v978 = vld [vmem:[%s3 + $0x30] sm:$0xff]
    %v979 = vld [vmem:[%s3 + $0x38] sm:$0xff]
    %v980 = vld [vmem:[%s3 + $0x40] sm:$0xff]
    %v981 = vld [vmem:[%s3 + $0x48] sm:$0xff]
    %v982 = vld [vmem:[%s3 + $0x50] sm:$0xff]
    %v983 = vld [vmem:[%s3 + $0x58] sm:$0xff]
    %v984 = vld [vmem:[%s3 + $0x60] sm:$0xff]
    %v985 = vld [vmem:[%s3 + $0x68] sm:$0xff]
    %v986 = vld [vmem:[%s3 + $0x70] sm:$0xff]
    %v987 = vld [vmem:[%s3 + $0x78] sm:$0xff]
    %v988 = vld [vmem:[%s3 + $0x80] sm:$0xff]
    %v989 = vld [vmem:[%s3 + $0x88] sm:$0xff]
    %v990 = vld [vmem:[%s3 + $0x90] sm:$0xff]
    %v991 = vld [vmem:[%s3 + $0x98] sm:$0xff]
    %v992 = vld [vmem:[%s3 + $0xa0] sm:$0xff]
    %v993 = vld [vmem:[%s3 + $0xa8] sm:$0xff]
    %v994 = vld [vmem:[%s3 + $0xb0] sm:$0x33]
    %v995 = vld [vmem:[%s4] sm:$0x3]
    %v997 = vlaneseq
    %v998 = vshrl.u32 %v997, 7
    %v999 = vsub.s32 0, %v998
    %v1000 = vrot.slane %v995, %v999
    %v1001 = vlaneseq
    %v1002 = vshrl.u32 %v1001, 7
    %v1003 = vsub.s32 1, %v1002
    %v1004 = vrot.slane %v995, %v1003
    %v1030 = vunpack.c.l.b16 %v972
    %v1031 = vunpack.c.h.b16 %v972
    %v1032 = vunpack.c.l.b16 %v973
    %v1033 = vunpack.c.h.b16 %v973
    %v1034 = vunpack.c.l.b16 %v974
    %v1035 = vunpack.c.h.b16 %v974
    %v1036 = vunpack.c.l.b16 %v975
    %v1037 = vunpack.c.h.b16 %v975
    %v1038 = vunpack.c.l.b16 %v976
    %v1039 = vunpack.c.h.b16 %v976
    %v1040 = vunpack.c.l.b16 %v977
    %v1041 = vunpack.c.h.b16 %v977
    %v1042 = vunpack.c.l.b16 %v978
    %v1043 = vunpack.c.h.b16 %v978
    %v1044 = vunpack.c.l.b16 %v979
    %v1045 = vunpack.c.h.b16 %v979
    %v1046 = vunpack.c.l.b16 %v980
    %v1047 = vunpack.c.h.b16 %v980
    %v1048 = vunpack.c.l.b16 %v981
    %v1049 = vunpack.c.h.b16 %v981
    %v1050 = vunpack.c.l.b16 %v982
    %v1051 = vunpack.c.h.b16 %v982
    %v1052 = vunpack.c.l.b16 %v983
    %v1053 = vunpack.c.h.b16 %v983
    %v1054 = vunpack.c.l.b16 %v984
    %v1055 = vunpack.c.h.b16 %v984
    %v1056 = vunpack.c.l.b16 %v985
    %v1057 = vunpack.c.h.b16 %v985
    %v1058 = vunpack.c.l.b16 %v986
    %v1059 = vunpack.c.h.b16 %v986
    %v1060 = vunpack.c.l.b16 %v987
    %v1061 = vunpack.c.h.b16 %v987
    %v1062 = vunpack.c.l.b16 %v988
    %v1063 = vunpack.c.h.b16 %v988
    %v1064 = vunpack.c.l.b16 %v989
    %v1065 = vunpack.c.h.b16 %v989
    %v1066 = vunpack.c.l.b16 %v990
    %v1067 = vunpack.c.h.b16 %v990
    %v1068 = vunpack.c.l.b16 %v991
    %v1069 = vunpack.c.h.b16 %v991
    %v1070 = vunpack.c.l.b16 %v992
    %v1071 = vunpack.c.h.b16 %v992
    %v1072 = vunpack.c.l.b16 %v993
    %v1073 = vunpack.c.h.b16 %v993
    %v1074 = vunpack.c.l.b16 %v994
    %v1075 = vunpack.c.h.b16 %v994
    %v1076 = vpack.c.b16 %v1032, %v1030
    %v1077 = vpack.c.b16 %v1033, %v1031
    %v1078 = vpack.c.b16 %v1036, %v1034
    %v1079 = vpack.c.b16 %v1037, %v1035
    %v1080 = vpack.c.b16 %v1040, %v1038
    %v1081 = vpack.c.b16 %v1041, %v1039
    %v1082 = vpack.c.b16 %v1044, %v1042
    %v1083 = vpack.c.b16 %v1045, %v1043
    %v1084 = vpack.c.b16 %v1048, %v1046
    %v1085 = vpack.c.b16 %v1049, %v1047
    %v1086 = vpack.c.b16 %v1052, %v1050
    %v1087 = vpack.c.b16 %v1053, %v1051
    %v1088 = vpack.c.b16 %v1056, %v1054
    %v1089 = vpack.c.b16 %v1057, %v1055
    %v1090 = vpack.c.b16 %v1060, %v1058
    %v1091 = vpack.c.b16 %v1061, %v1059
    %v1092 = vpack.c.b16 %v1064, %v1062
    %v1093 = vpack.c.b16 %v1065, %v1063
    %v1094 = vpack.c.b16 %v1068, %v1066
    %v1095 = vpack.c.b16 %v1069, %v1067
    %v1096 = vpack.c.b16 %v1072, %v1070
    %v1097 = vpack.c.b16 %v1073, %v1071
    %v1098 = vpack.c.b16 %v1074, %v1074
    %v1099 = vpack.c.b16 %v1075, %v1075
    %vm1122 = vcmask 424960
    %v1124 = vsel %vm1122, %v971, 0
    %v1127 = vsel %vm787, %v1098, 0
    %v1130 = vsel %vm787, %v1099, 0
    %1132 = vmatprep.subr.bf16.mxu0 %v1077
    %1133 = vmatpush1.bf16.msra.mxu0 %v1076
    %1134 = vmatprep.subr.bf16.mxu0 %v1079
    %1135 = vmatpush1.bf16.msra.mxu0 %v1078
    %1136 = vmatprep.subr.bf16.mxu0 %v1081
    %1137 = vmatpush1.bf16.msra.mxu0 %v1080
    %1138 = vmatprep.subr.bf16.mxu0 %v1083
    %1139 = vmatpush1.bf16.msra.mxu0 %v1082
    %1140 = vmatprep.subr.bf16.mxu0 %v1085
    %1141 = vmatpush1.bf16.msra.mxu0 %v1084
    %1142 = vmatprep.subr.bf16.mxu0 %v1087
    %1143 = vmatpush1.bf16.msra.mxu0 %v1086
    %1144 = vmatprep.subr.bf16.mxu0 %v1089
    %1145 = vmatpush1.bf16.msra.mxu0 %v1088
    %1146 = vmatprep.subr.bf16.mxu0 %v1091
    %1147 = vmatpush1.bf16.msra.mxu0 %v1090
    %1148 = vmatprep.subr.bf16.mxu0 %v1093
    %1149 = vmatpush1.bf16.msra.mxu0 %v1092
    %1150 = vmatprep.subr.bf16.mxu0 %v1095
    %1151 = vmatpush1.bf16.msra.mxu0 %v1094
    %1152 = vmatprep.subr.bf16.mxu0 %v1097
    %1153 = vmatpush1.bf16.msra.mxu0 %v1096
    %1154 = vmatprep.subr.bf16.mxu0 %v1130
    %1155 = vmatpush1.bf16.msra.mxu0 %v1127
    %1156 = vmatprep.subr.bf16.mxu0 0
    %1157 = vmatpush1.bf16.msra.mxu0 0
    %1158 = vmatprep.subr.bf16.mxu0 0
    %1159 = vmatpush1.bf16.msra.mxu0 0
    %1160 = vmatprep.subr.bf16.mxu0 0
    %1161 = vmatpush1.bf16.msra.mxu0 0
    %1162 = vmatprep.subr.bf16.mxu0 0
    %1163 = vmatpush1.bf16.msra.mxu0 0
    %1164 = vmatprep.mubr.bf16.mxu0 %v1124
    %1165 = vmatmul.mubr.bf16.gmra.mrb[0].mxu0 %v970
    %v1166 = vpop.f32.mrb[0].mxu0
    %v1167 = vadd.f32 %v1000, %v1166
    %v1168 = vpop.f32.mrb[0].mxu0
    %v1169 = vadd.f32 %v1004, %v1168
    %v1170 = vpop.f32.mrb[0].mxu0
    %v1171 = vadd.f32 %v1000, %v1170
    %v1172 = vpop.f32.mrb[0].mxu0
    %v1173 = vadd.f32 %v1004, %v1172
    %1174 = vdwg.mxu0
    %v1175 = vtanh.pop %v1167
    %v1176 = vtanh.pop %v1169
    %v1177 = vtanh.pop %v1171
    %v1178 = vtanh.pop %v1173
    %v1179 = vpack.c.bf16 %v1177, %v1175
    %v1180 = vpack.c.bf16 %v1178, %v1176
    %v1181 = vld [vmem:[%s5] sm:$0xff]
    %v1182 = vld [vmem:[%s5 + $0x8] sm:$0xff]
    %v1183 = vld [vmem:[%s5 + $0x10] sm:$0xff]
    %v1184 = vld [vmem:[%s5 + $0x18] sm:$0xff]
    %v1185 = vld [vmem:[%s5 + $0x20] sm:$0xff]
    %v1186 = vld [vmem:[%s5 + $0x28] sm:$0xff]
    %v1187 = vld [vmem:[%s5 + $0x30] sm:$0xff]
    %v1188 = vld [vmem:[%s5 + $0x38] sm:$0xff]
    %v1189 = vld [vmem:[%s5 + $0x40] sm:$0xff]
    %v1190 = vld [vmem:[%s5 + $0x48] sm:$0xff]
    %v1191 = vld [vmem:[%s5 + $0x50] sm:$0xff]
    %v1192 = vld [vmem:[%s5 + $0x58] sm:$0xff]
    %v1193 = vld [vmem:[%s5 + $0x60] sm:$0xff]
    %v1194 = vld [vmem:[%s5 + $0x68] sm:$0xff]
    %v1195 = vld [vmem:[%s5 + $0x70] sm:$0xff]
    %v1196 = vld [vmem:[%s5 + $0x78] sm:$0xff]
    %v1197 = vld [vmem:[%s5 + $0x80] sm:$0xff]
    %v1198 = vld [vmem:[%s5 + $0x88] sm:$0xff]
    %v1199 = vld [vmem:[%s5 + $0x90] sm:$0xff]
    %v1200 = vld [vmem:[%s5 + $0x98] sm:$0xff]
    %v1201 = vld [vmem:[%s5 + $0xa0] sm:$0xff]
    %v1202 = vld [vmem:[%s5 + $0xa8] sm:$0xff]
    %v1203 = vld [vmem:[%s5 + $0xb0] sm:$0x33]
    %v1204 = vld [vmem:[%s6] sm:$0x3]
    %v1206 = vlaneseq
    %v1207 = vshrl.u32 %v1206, 7
    %v1208 = vsub.s32 0, %v1207
    %v1209 = vrot.slane %v1204, %v1208
    %v1210 = vlaneseq
    %v1211 = vshrl.u32 %v1210, 7
    %v1212 = vsub.s32 1, %v1211
    %v1213 = vrot.slane %v1204, %v1212
    %v1239 = vunpack.c.l.b16 %v1181
    %v1240 = vunpack.c.h.b16 %v1181
    %v1241 = vunpack.c.l.b16 %v1182
    %v1242 = vunpack.c.h.b16 %v1182
    %v1243 = vunpack.c.l.b16 %v1183
    %v1244 = vunpack.c.h.b16 %v1183
    %v1245 = vunpack.c.l.b16 %v1184
    %v1246 = vunpack.c.h.b16 %v1184
    %v1247 = vunpack.c.l.b16 %v1185
    %v1248 = vunpack.c.h.b16 %v1185
    %v1249 = vunpack.c.l.b16 %v1186
    %v1250 = vunpack.c.h.b16 %v1186
    %v1251 = vunpack.c.l.b16 %v1187
    %v1252 = vunpack.c.h.b16 %v1187
    %v1253 = vunpack.c.l.b16 %v1188
    %v1254 = vunpack.c.h.b16 %v1188
    %v1255 = vunpack.c.l.b16 %v1189
    %v1256 = vunpack.c.h.b16 %v1189
    %v1257 = vunpack.c.l.b16 %v1190
    %v1258 = vunpack.c.h.b16 %v1190
    %v1259 = vunpack.c.l.b16 %v1191
    %v1260 = vunpack.c.h.b16 %v1191
    %v1261 = vunpack.c.l.b16 %v1192
    %v1262 = vunpack.c.h.b16 %v1192
    %v1263 = vunpack.c.l.b16 %v1193
    %v1264 = vunpack.c.h.b16 %v1193
    %v1265 = vunpack.c.l.b16 %v1194
    %v1266 = vunpack.c.h.b16 %v1194
    %v1267 = vunpack.c.l.b16 %v1195
    %v1268 = vunpack.c.h.b16 %v1195
    %v1269 = vunpack.c.l.b16 %v1196
    %v1270 = vunpack.c.h.b16 %v1196
    %v1271 = vunpack.c.l.b16 %v1197
    %v1272 = vunpack.c.h.b16 %v1197
    %v1273 = vunpack.c.l.b16 %v1198
    %v1274 = vunpack.c.h.b16 %v1198
    %v1275 = vunpack.c.l.b16 %v1199
    %v1276 = vunpack.c.h.b16 %v1199
    %v1277 = vunpack.c.l.b16 %v1200
    %v1278 = vunpack.c.h.b16 %v1200
    %v1279 = vunpack.c.l.b16 %v1201
    %v1280 = vunpack.c.h.b16 %v1201
    %v1281 = vunpack.c.l.b16 %v1202
    %v1282 = vunpack.c.h.b16 %v1202
    %v1283 = vunpack.c.l.b16 %v1203
    %v1284 = vunpack.c.h.b16 %v1203
    %v1285 = vpack.c.b16 %v1241, %v1239
    %v1286 = vpack.c.b16 %v1242, %v1240
    %v1287 = vpack.c.b16 %v1245, %v1243
    %v1288 = vpack.c.b16 %v1246, %v1244
    %v1289 = vpack.c.b16 %v1249, %v1247
    %v1290 = vpack.c.b16 %v1250, %v1248
    %v1291 = vpack.c.b16 %v1253, %v1251
    %v1292 = vpack.c.b16 %v1254, %v1252
    %v1293 = vpack.c.b16 %v1257, %v1255
    %v1294 = vpack.c.b16 %v1258, %v1256
    %v1295 = vpack.c.b16 %v1261, %v1259
    %v1296 = vpack.c.b16 %v1262, %v1260
    %v1297 = vpack.c.b16 %v1265, %v1263
    %v1298 = vpack.c.b16 %v1266, %v1264
    %v1299 = vpack.c.b16 %v1269, %v1267
    %v1300 = vpack.c.b16 %v1270, %v1268
    %v1301 = vpack.c.b16 %v1273, %v1271
    %v1302 = vpack.c.b16 %v1274, %v1272
    %v1303 = vpack.c.b16 %v1277, %v1275
    %v1304 = vpack.c.b16 %v1278, %v1276
    %v1305 = vpack.c.b16 %v1281, %v1279
    %v1306 = vpack.c.b16 %v1282, %v1280
    %v1307 = vpack.c.b16 %v1283, %v1283
    %v1308 = vpack.c.b16 %v1284, %v1284
    %v1332 = vsel %vm1122, %v1180, 0
    %v1335 = vsel %vm787, %v1307, 0
    %v1338 = vsel %vm787, %v1308, 0
    %1340 = vmatprep.subr.bf16.mxu0 %v1286
    %1341 = vmatpush1.bf16.msra.mxu0 %v1285
    %1342 = vmatprep.subr.bf16.mxu0 %v1288
    %1343 = vmatpush1.bf16.msra.mxu0 %v1287
    %1344 = vmatprep.subr.bf16.mxu0 %v1290
    %1345 = vmatpush1.bf16.msra.mxu0 %v1289
    %1346 = vmatprep.subr.bf16.mxu0 %v1292
    %1347 = vmatpush1.bf16.msra.mxu0 %v1291
    %1348 = vmatprep.subr.bf16.mxu0 %v1294
    %1349 = vmatpush1.bf16.msra.mxu0 %v1293
    %1350 = vmatprep.subr.bf16.mxu0 %v1296
    %1351 = vmatpush1.bf16.msra.mxu0 %v1295
    %1352 = vmatprep.subr.bf16.mxu0 %v1298
    %1353 = vmatpush1.bf16.msra.mxu0 %v1297
    %1354 = vmatprep.subr.bf16.mxu0 %v1300
    %1355 = vmatpush1.bf16.msra.mxu0 %v1299
    %1356 = vmatprep.subr.bf16.mxu0 %v1302
    %1357 = vmatpush1.bf16.msra.mxu0 %v1301
    %1358 = vmatprep.subr.bf16.mxu0 %v1304
    %1359 = vmatpush1.bf16.msra.mxu0 %v1303
    %1360 = vmatprep.subr.bf16.mxu0 %v1306
    %1361 = vmatpush1.bf16.msra.mxu0 %v1305
    %1362 = vmatprep.subr.bf16.mxu0 %v1338
    %1363 = vmatpush1.bf16.msra.mxu0 %v1335
    %1364 = vmatprep.subr.bf16.mxu0 0
    %1365 = vmatpush1.bf16.msra.mxu0 0
    %1366 = vmatprep.subr.bf16.mxu0 0
    %1367 = vmatpush1.bf16.msra.mxu0 0
    %1368 = vmatprep.subr.bf16.mxu0 0
    %1369 = vmatpush1.bf16.msra.mxu0 0
    %1370 = vmatprep.subr.bf16.mxu0 0
    %1371 = vmatpush1.bf16.msra.mxu0 0
    %1372 = vmatprep.mubr.bf16.mxu0 %v1332
    %1373 = vmatmul.mubr.bf16.gmra.mrb[0].mxu0 %v1179
    %v1374 = vpop.f32.mrb[0].mxu0
    %v1375 = vadd.f32 %v1209, %v1374
    %v1376 = vpop.f32.mrb[0].mxu0
    %v1377 = vadd.f32 %v1213, %v1376
    %v1378 = vpop.f32.mrb[0].mxu0
    %v1379 = vadd.f32 %v1209, %v1378
    %v1380 = vpop.f32.mrb[0].mxu0
    %v1381 = vadd.f32 %v1213, %v1380
    %1382 = vdwg.mxu0
    %v1383 = vtanh.pop %v1375
    %v1384 = vtanh.pop %v1377
    %v1385 = vtanh.pop %v1379
    %v1386 = vtanh.pop %v1381
    %v1387 = vpack.c.bf16 %v1385, %v1383
    %v1388 = vpack.c.bf16 %v1386, %v1384
    %v1389 = vld [vmem:[%s7] sm:$0xff]
    %v1390 = vld [vmem:[%s7 + $0x8] sm:$0xff]
    %v1391 = vld [vmem:[%s7 + $0x10] sm:$0xff]
    %v1392 = vld [vmem:[%s7 + $0x18] sm:$0xff]
    %v1393 = vld [vmem:[%s7 + $0x20] sm:$0xff]
    %v1394 = vld [vmem:[%s7 + $0x28] sm:$0xff]
    %v1395 = vld [vmem:[%s7 + $0x30] sm:$0xff]
    %v1396 = vld [vmem:[%s7 + $0x38] sm:$0xff]
    %v1397 = vld [vmem:[%s7 + $0x40] sm:$0xff]
    %v1398 = vld [vmem:[%s7 + $0x48] sm:$0xff]
    %v1399 = vld [vmem:[%s7 + $0x50] sm:$0xff]
    %v1400 = vld [vmem:[%s7 + $0x58] sm:$0xff]
    %v1401 = vld [vmem:[%s7 + $0x60] sm:$0xff]
    %v1402 = vld [vmem:[%s7 + $0x68] sm:$0xff]
    %v1403 = vld [vmem:[%s7 + $0x70] sm:$0xff]
    %v1404 = vld [vmem:[%s7 + $0x78] sm:$0xff]
    %v1405 = vld [vmem:[%s7 + $0x80] sm:$0xff]
    %v1406 = vld [vmem:[%s7 + $0x88] sm:$0xff]
    %v1407 = vld [vmem:[%s7 + $0x90] sm:$0xff]
    %v1408 = vld [vmem:[%s7 + $0x98] sm:$0xff]
    %v1409 = vld [vmem:[%s7 + $0xa0] sm:$0xff]
    %v1410 = vld [vmem:[%s7 + $0xa8] sm:$0xff]
    %v1411 = vld [vmem:[%s7 + $0xb0] sm:$0x33]
    %v1412 = vld [vmem:[%s8] sm:$0x3]
    %v1414 = vlaneseq
    %v1415 = vshrl.u32 %v1414, 7
    %v1416 = vsub.s32 0, %v1415
    %v1417 = vrot.slane %v1412, %v1416
    %v1418 = vlaneseq
    %v1419 = vshrl.u32 %v1418, 7
    %v1420 = vsub.s32 1, %v1419
    %v1421 = vrot.slane %v1412, %v1420
    %v1447 = vunpack.c.l.b16 %v1389
    %v1448 = vunpack.c.h.b16 %v1389
    %v1449 = vunpack.c.l.b16 %v1390
    %v1450 = vunpack.c.h.b16 %v1390
    %v1451 = vunpack.c.l.b16 %v1391
    %v1452 = vunpack.c.h.b16 %v1391
    %v1453 = vunpack.c.l.b16 %v1392
    %v1454 = vunpack.c.h.b16 %v1392
    %v1455 = vunpack.c.l.b16 %v1393
    %v1456 = vunpack.c.h.b16 %v1393
    %v1457 = vunpack.c.l.b16 %v1394
    %v1458 = vunpack.c.h.b16 %v1394
    %v1459 = vunpack.c.l.b16 %v1395
    %v1460 = vunpack.c.h.b16 %v1395
    %v1461 = vunpack.c.l.b16 %v1396
    %v1462 = vunpack.c.h.b16 %v1396
    %v1463 = vunpack.c.l.b16 %v1397
    %v1464 = vunpack.c.h.b16 %v1397
    %v1465 = vunpack.c.l.b16 %v1398
    %v1466 = vunpack.c.h.b16 %v1398
    %v1467 = vunpack.c.l.b16 %v1399
    %v1468 = vunpack.c.h.b16 %v1399
    %v1469 = vunpack.c.l.b16 %v1400
    %v1470 = vunpack.c.h.b16 %v1400
    %v1471 = vunpack.c.l.b16 %v1401
    %v1472 = vunpack.c.h.b16 %v1401
    %v1473 = vunpack.c.l.b16 %v1402
    %v1474 = vunpack.c.h.b16 %v1402
    %v1475 = vunpack.c.l.b16 %v1403
    %v1476 = vunpack.c.h.b16 %v1403
    %v1477 = vunpack.c.l.b16 %v1404
    %v1478 = vunpack.c.h.b16 %v1404
    %v1479 = vunpack.c.l.b16 %v1405
    %v1480 = vunpack.c.h.b16 %v1405
    %v1481 = vunpack.c.l.b16 %v1406
    %v1482 = vunpack.c.h.b16 %v1406
    %v1483 = vunpack.c.l.b16 %v1407
    %v1484 = vunpack.c.h.b16 %v1407
    %v1485 = vunpack.c.l.b16 %v1408
    %v1486 = vunpack.c.h.b16 %v1408
    %v1487 = vunpack.c.l.b16 %v1409
    %v1488 = vunpack.c.h.b16 %v1409
    %v1489 = vunpack.c.l.b16 %v1410
    %v1490 = vunpack.c.h.b16 %v1410
    %v1491 = vunpack.c.l.b16 %v1411
    %v1492 = vunpack.c.h.b16 %v1411
    %v1493 = vpack.c.b16 %v1449, %v1447
    %v1494 = vpack.c.b16 %v1450, %v1448
    %v1495 = vpack.c.b16 %v1453, %v1451
    %v1496 = vpack.c.b16 %v1454, %v1452
    %v1497 = vpack.c.b16 %v1457, %v1455
    %v1498 = vpack.c.b16 %v1458, %v1456
    %v1499 = vpack.c.b16 %v1461, %v1459
    %v1500 = vpack.c.b16 %v1462, %v1460
    %v1501 = vpack.c.b16 %v1465, %v1463
    %v1502 = vpack.c.b16 %v1466, %v1464
    %v1503 = vpack.c.b16 %v1469, %v1467
    %v1504 = vpack.c.b16 %v1470, %v1468
    %v1505 = vpack.c.b16 %v1473, %v1471
    %v1506 = vpack.c.b16 %v1474, %v1472
    %v1507 = vpack.c.b16 %v1477, %v1475
    %v1508 = vpack.c.b16 %v1478, %v1476
    %v1509 = vpack.c.b16 %v1481, %v1479
    %v1510 = vpack.c.b16 %v1482, %v1480
    %v1511 = vpack.c.b16 %v1485, %v1483
    %v1512 = vpack.c.b16 %v1486, %v1484
    %v1513 = vpack.c.b16 %v1489, %v1487
    %v1514 = vpack.c.b16 %v1490, %v1488
    %v1515 = vpack.c.b16 %v1491, %v1491
    %v1516 = vpack.c.b16 %v1492, %v1492
    %v1540 = vsel %vm1122, %v1388, 0
    %v1543 = vsel %vm787, %v1515, 0
    %v1546 = vsel %vm787, %v1516, 0
    %1548 = vmatprep.subr.bf16.mxu0 %v1494
    %1549 = vmatpush1.bf16.msra.mxu0 %v1493
    %1550 = vmatprep.subr.bf16.mxu0 %v1496
    %1551 = vmatpush1.bf16.msra.mxu0 %v1495
    %1552 = vmatprep.subr.bf16.mxu0 %v1498
    %1553 = vmatpush1.bf16.msra.mxu0 %v1497
    %1554 = vmatprep.subr.bf16.mxu0 %v1500
    %1555 = vmatpush1.bf16.msra.mxu0 %v1499
    %1556 = vmatprep.subr.bf16.mxu0 %v1502
    %1557 = vmatpush1.bf16.msra.mxu0 %v1501
    %1558 = vmatprep.subr.bf16.mxu0 %v1504
    %1559 = vmatpush1.bf16.msra.mxu0 %v1503
    %1560 = vmatprep.subr.bf16.mxu0 %v1506
    %1561 = vmatpush1.bf16.msra.mxu0 %v1505
    %1562 = vmatprep.subr.bf16.mxu0 %v1508
    %1563 = vmatpush1.bf16.msra.mxu0 %v1507
    %1564 = vmatprep.subr.bf16.mxu0 %v1510
    %1565 = vmatpush1.bf16.msra.mxu0 %v1509
    %1566 = vmatprep.subr.bf16.mxu0 %v1512
    %1567 = vmatpush1.bf16.msra.mxu0 %v1511
    %1568 = vmatprep.subr.bf16.mxu0 %v1514
    %1569 = vmatpush1.bf16.msra.mxu0 %v1513
    %1570 = vmatprep.subr.bf16.mxu0 %v1546
    %1571 = vmatpush1.bf16.msra.mxu0 %v1543
    %1572 = vmatprep.subr.bf16.mxu0 0
    %1573 = vmatpush1.bf16.msra.mxu0 0
    %1574 = vmatprep.subr.bf16.mxu0 0
    %1575 = vmatpush1.bf16.msra.mxu0 0
    %1576 = vmatprep.subr.bf16.mxu0 0
    %1577 = vmatpush1.bf16.msra.mxu0 0
    %1578 = vmatprep.subr.bf16.mxu0 0
    %1579 = vmatpush1.bf16.msra.mxu0 0
    %1580 = vmatprep.mubr.bf16.mxu0 %v1540
    %1581 = vmatmul.mubr.bf16.gmra.mrb[0].mxu0 %v1387
    %v1582 = vpop.f32.mrb[0].mxu0
    %v1583 = vadd.f32 %v1417, %v1582
    %v1584 = vpop.f32.mrb[0].mxu0
    %v1585 = vadd.f32 %v1421, %v1584
    %v1586 = vpop.f32.mrb[0].mxu0
    %v1587 = vadd.f32 %v1417, %v1586
    %v1588 = vpop.f32.mrb[0].mxu0
    %v1589 = vadd.f32 %v1421, %v1588
    %1590 = vdwg.mxu0
    %v1591 = vtanh.pop %v1583
    %v1592 = vtanh.pop %v1585
    %v1593 = vtanh.pop %v1587
    %v1594 = vtanh.pop %v1589
    %v1595 = vpack.c.bf16 %v1593, %v1591
    %v1596 = vpack.c.bf16 %v1594, %v1592
    %v1597 = vld [vmem:[%s9] sm:$0xff]
    %v1598 = vld [vmem:[%s9 + $0x8] sm:$0xff]
    %v1599 = vld [vmem:[%s9 + $0x10] sm:$0xff]
    %v1600 = vld [vmem:[%s9 + $0x18] sm:$0xff]
    %v1601 = vld [vmem:[%s9 + $0x20] sm:$0xff]
    %v1602 = vld [vmem:[%s9 + $0x28] sm:$0xff]
    %v1603 = vld [vmem:[%s9 + $0x30] sm:$0xff]
    %v1604 = vld [vmem:[%s9 + $0x38] sm:$0xff]
    %v1605 = vld [vmem:[%s9 + $0x40] sm:$0xff]
    %v1606 = vld [vmem:[%s9 + $0x48] sm:$0xff]
    %v1607 = vld [vmem:[%s9 + $0x50] sm:$0xff]
    %v1608 = vld [vmem:[%s9 + $0x58] sm:$0xff]
    %v1609 = vld [vmem:[%s9 + $0x60] sm:$0xff]
    %v1610 = vld [vmem:[%s9 + $0x68] sm:$0xff]
    %v1611 = vld [vmem:[%s9 + $0x70] sm:$0xff]
    %v1612 = vld [vmem:[%s9 + $0x78] sm:$0xff]
    %v1613 = vld [vmem:[%s9 + $0x80] sm:$0xff]
    %v1614 = vld [vmem:[%s9 + $0x88] sm:$0xff]
    %v1615 = vld [vmem:[%s9 + $0x90] sm:$0xff]
    %v1616 = vld [vmem:[%s9 + $0x98] sm:$0xff]
    %v1617 = vld [vmem:[%s9 + $0xa0] sm:$0xff]
    %v1618 = vld [vmem:[%s9 + $0xa8] sm:$0xff]
    %v1619 = vld [vmem:[%s9 + $0xb0] sm:$0x33]
    %v1620 = vld [vmem:[%s10] sm:$0x3]
    %v1622 = vlaneseq
    %v1623 = vshrl.u32 %v1622, 7
    %v1624 = vsub.s32 0, %v1623
    %v1625 = vrot.slane %v1620, %v1624
    %v1626 = vlaneseq
    %v1627 = vshrl.u32 %v1626, 7
    %v1628 = vsub.s32 1, %v1627
    %v1629 = vrot.slane %v1620, %v1628
    %v1655 = vunpack.c.l.b16 %v1597
    %v1656 = vunpack.c.h.b16 %v1597
    %v1657 = vunpack.c.l.b16 %v1598
    %v1658 = vunpack.c.h.b16 %v1598
    %v1659 = vunpack.c.l.b16 %v1599
    %v1660 = vunpack.c.h.b16 %v1599
    %v1661 = vunpack.c.l.b16 %v1600
    %v1662 = vunpack.c.h.b16 %v1600
    %v1663 = vunpack.c.l.b16 %v1601
    %v1664 = vunpack.c.h.b16 %v1601
    %v1665 = vunpack.c.l.b16 %v1602
    %v1666 = vunpack.c.h.b16 %v1602
    %v1667 = vunpack.c.l.b16 %v1603
    %v1668 = vunpack.c.h.b16 %v1603
    %v1669 = vunpack.c.l.b16 %v1604
    %v1670 = vunpack.c.h.b16 %v1604
    %v1671 = vunpack.c.l.b16 %v1605
    %v1672 = vunpack.c.h.b16 %v1605
    %v1673 = vunpack.c.l.b16 %v1606
    %v1674 = vunpack.c.h.b16 %v1606
    %v1675 = vunpack.c.l.b16 %v1607
    %v1676 = vunpack.c.h.b16 %v1607
    %v1677 = vunpack.c.l.b16 %v1608
    %v1678 = vunpack.c.h.b16 %v1608
    %v1679 = vunpack.c.l.b16 %v1609
    %v1680 = vunpack.c.h.b16 %v1609
    %v1681 = vunpack.c.l.b16 %v1610
    %v1682 = vunpack.c.h.b16 %v1610
    %v1683 = vunpack.c.l.b16 %v1611
    %v1684 = vunpack.c.h.b16 %v1611
    %v1685 = vunpack.c.l.b16 %v1612
    %v1686 = vunpack.c.h.b16 %v1612
    %v1687 = vunpack.c.l.b16 %v1613
    %v1688 = vunpack.c.h.b16 %v1613
    %v1689 = vunpack.c.l.b16 %v1614
    %v1690 = vunpack.c.h.b16 %v1614
    %v1691 = vunpack.c.l.b16 %v1615
    %v1692 = vunpack.c.h.b16 %v1615
    %v1693 = vunpack.c.l.b16 %v1616
    %v1694 = vunpack.c.h.b16 %v1616
    %v1695 = vunpack.c.l.b16 %v1617
    %v1696 = vunpack.c.h.b16 %v1617
    %v1697 = vunpack.c.l.b16 %v1618
    %v1698 = vunpack.c.h.b16 %v1618
    %v1699 = vunpack.c.l.b16 %v1619
    %v1700 = vunpack.c.h.b16 %v1619
    %v1701 = vpack.c.b16 %v1657, %v1655
    %v1702 = vpack.c.b16 %v1658, %v1656
    %v1703 = vpack.c.b16 %v1661, %v1659
    %v1704 = vpack.c.b16 %v1662, %v1660
    %v1705 = vpack.c.b16 %v1665, %v1663
    %v1706 = vpack.c.b16 %v1666, %v1664
    %v1707 = vpack.c.b16 %v1669, %v1667
    %v1708 = vpack.c.b16 %v1670, %v1668
    %v1709 = vpack.c.b16 %v1673, %v1671
    %v1710 = vpack.c.b16 %v1674, %v1672
    %v1711 = vpack.c.b16 %v1677, %v1675
    %v1712 = vpack.c.b16 %v1678, %v1676
    %v1713 = vpack.c.b16 %v1681, %v1679
    %v1714 = vpack.c.b16 %v1682, %v1680
    %v1715 = vpack.c.b16 %v1685, %v1683
    %v1716 = vpack.c.b16 %v1686, %v1684
    %v1717 = vpack.c.b16 %v1689, %v1687
    %v1718 = vpack.c.b16 %v1690, %v1688
    %v1719 = vpack.c.b16 %v1693, %v1691
    %v1720 = vpack.c.b16 %v1694, %v1692
    %v1721 = vpack.c.b16 %v1697, %v1695
    %v1722 = vpack.c.b16 %v1698, %v1696
    %v1723 = vpack.c.b16 %v1699, %v1699
    %v1724 = vpack.c.b16 %v1700, %v1700
    %v1748 = vsel %vm1122, %v1596, 0
    %v1751 = vsel %vm787, %v1723, 0
    %v1754 = vsel %vm787, %v1724, 0
    %1756 = vmatprep.subr.bf16.mxu0 %v1702
    %1757 = vmatpush1.bf16.msra.mxu0 %v1701
    %1758 = vmatprep.subr.bf16.mxu0 %v1704
    %1759 = vmatpush1.bf16.msra.mxu0 %v1703
    %1760 = vmatprep.subr.bf16.mxu0 %v1706
    %1761 = vmatpush1.bf16.msra.mxu0 %v1705
    %1762 = vmatprep.subr.bf16.mxu0 %v1708
    %1763 = vmatpush1.bf16.msra.mxu0 %v1707
    %1764 = vmatprep.subr.bf16.mxu0 %v1710
    %1765 = vmatpush1.bf16.msra.mxu0 %v1709
    %1766 = vmatprep.subr.bf16.mxu0 %v1712
    %1767 = vmatpush1.bf16.msra.mxu0 %v1711
    %1768 = vmatprep.subr.bf16.mxu0 %v1714
    %1769 = vmatpush1.bf16.msra.mxu0 %v1713
    %1770 = vmatprep.subr.bf16.mxu0 %v1716
    %1771 = vmatpush1.bf16.msra.mxu0 %v1715
    %1772 = vmatprep.subr.bf16.mxu0 %v1718
    %1773 = vmatpush1.bf16.msra.mxu0 %v1717
    %1774 = vmatprep.subr.bf16.mxu0 %v1720
    %1775 = vmatpush1.bf16.msra.mxu0 %v1719
    %1776 = vmatprep.subr.bf16.mxu0 %v1722
    %1777 = vmatpush1.bf16.msra.mxu0 %v1721
    %1778 = vmatprep.subr.bf16.mxu0 %v1754
    %1779 = vmatpush1.bf16.msra.mxu0 %v1751
    %1780 = vmatprep.subr.bf16.mxu0 0
    %1781 = vmatpush1.bf16.msra.mxu0 0
    %1782 = vmatprep.subr.bf16.mxu0 0
    %1783 = vmatpush1.bf16.msra.mxu0 0
    %1784 = vmatprep.subr.bf16.mxu0 0
    %1785 = vmatpush1.bf16.msra.mxu0 0
    %1786 = vmatprep.subr.bf16.mxu0 0
    %1787 = vmatpush1.bf16.msra.mxu0 0
    %1788 = vmatprep.mubr.bf16.mxu0 %v1748
    %1789 = vmatmul.mubr.bf16.gmra.mrb[0].mxu0 %v1595
    %v1790 = vpop.f32.mrb[0].mxu0
    %v1791 = vadd.f32 %v1625, %v1790
    %v1792 = vpop.f32.mrb[0].mxu0
    %v1793 = vadd.f32 %v1629, %v1792
    %v1794 = vpop.f32.mrb[0].mxu0
    %v1795 = vadd.f32 %v1625, %v1794
    %v1796 = vpop.f32.mrb[0].mxu0
    %v1797 = vadd.f32 %v1629, %v1796
    %1798 = vdwg.mxu0
    %v1799 = vtanh.pop %v1791
    %v1800 = vtanh.pop %v1793
    %v1801 = vtanh.pop %v1795
    %v1802 = vtanh.pop %v1797
    %v1803 = vpack.c.bf16 %v1801, %v1799
    %v1804 = vpack.c.bf16 %v1802, %v1800
    %v1805 = vld [vmem:[%s11] sm:$0xf]
    %v1806 = vld [vmem:[%s11 + $0x4] sm:$0xf]
    %v1807 = vld [vmem:[%s11 + $0x8] sm:$0xf]
    %v1808 = vld [vmem:[%s11 + $0xc] sm:$0xf]
    %v1809 = vld [vmem:[%s11 + $0x10] sm:$0xf]
    %v1810 = vld [vmem:[%s11 + $0x14] sm:$0xf]
    %v1811 = vld [vmem:[%s11 + $0x18] sm:$0xf]
    %v1812 = vld [vmem:[%s11 + $0x1c] sm:$0xf]
    %v1813 = vld [vmem:[%s11 + $0x20] sm:$0xf]
    %v1814 = vld [vmem:[%s11 + $0x24] sm:$0xf]
    %v1815 = vld [vmem:[%s11 + $0x28] sm:$0xf]
    %v1816 = vld [vmem:[%s11 + $0x2c] sm:$0xf]
    %v1817 = vld [vmem:[%s11 + $0x30] sm:$0xf]
    %v1818 = vld [vmem:[%s11 + $0x34] sm:$0xf]
    %v1819 = vld [vmem:[%s11 + $0x38] sm:$0xf]
    %v1820 = vld [vmem:[%s11 + $0x3c] sm:$0xf]
    %v1821 = vld [vmem:[%s11 + $0x40] sm:$0xf]
    %v1822 = vld [vmem:[%s11 + $0x44] sm:$0xf]
    %v1823 = vld [vmem:[%s11 + $0x48] sm:$0xf]
    %v1824 = vld [vmem:[%s11 + $0x4c] sm:$0xf]
    %v1825 = vld [vmem:[%s11 + $0x50] sm:$0xf]
    %v1826 = vld [vmem:[%s11 + $0x54] sm:$0xf]
    %v1827 = vld [vmem:[%s11 + $0x58] sm:$0x3]
    %v1828 = vld [vmem:[%s12] sm:$0x1]
    %v1830 = vlaneseq
    %v1831 = vshrl.u32 %v1830, 7
    %v1832 = vsub.s32 0, %v1831
    %v1833 = vrot.slane %v1828, %v1832
    %v1858 = vunpack.c.l.b16 %v1805
    %v1859 = vunpack.c.l.b16 %v1806
    %v1860 = vunpack.c.l.b16 %v1807
    %v1861 = vunpack.c.l.b16 %v1808
    %v1862 = vunpack.c.l.b16 %v1809
    %v1863 = vunpack.c.l.b16 %v1810
    %v1864 = vunpack.c.l.b16 %v1811
    %v1865 = vunpack.c.l.b16 %v1812
    %v1866 = vunpack.c.l.b16 %v1813
    %v1867 = vunpack.c.l.b16 %v1814
    %v1868 = vunpack.c.l.b16 %v1815
    %v1869 = vunpack.c.l.b16 %v1816
    %v1870 = vunpack.c.l.b16 %v1817
    %v1871 = vunpack.c.l.b16 %v1818
    %v1872 = vunpack.c.l.b16 %v1819
    %v1873 = vunpack.c.l.b16 %v1820
    %v1874 = vunpack.c.l.b16 %v1821
    %v1875 = vunpack.c.l.b16 %v1822
    %v1876 = vunpack.c.l.b16 %v1823
    %v1877 = vunpack.c.l.b16 %v1824
    %v1878 = vunpack.c.l.b16 %v1825
    %v1879 = vunpack.c.l.b16 %v1826
    %v1880 = vunpack.c.l.b16 %v1827
    %v1881 = vpack.c.b16 %v1859, %v1858
    %v1882 = vpack.c.b16 %v1861, %v1860
    %v1883 = vpack.c.b16 %v1863, %v1862
    %v1884 = vpack.c.b16 %v1865, %v1864
    %v1885 = vpack.c.b16 %v1867, %v1866
    %v1886 = vpack.c.b16 %v1869, %v1868
    %v1887 = vpack.c.b16 %v1871, %v1870
    %v1888 = vpack.c.b16 %v1873, %v1872
    %v1889 = vpack.c.b16 %v1875, %v1874
    %v1890 = vpack.c.b16 %v1877, %v1876
    %v1891 = vpack.c.b16 %v1879, %v1878
    %v1892 = vpack.c.b16 %v1880, %v1880
    %v1905 = vsel %vm1122, %v1804, 0
    %v1908 = vsel %vm787, %v1892, 0
    %1910 = vmatprep.subr.bf16.mxu0 0
    %1911 = vmatpush1.bf16.msra.mxu0 %v1881
    %1912 = vmatprep.subr.bf16.mxu0 0
    %1913 = vmatpush1.bf16.msra.mxu0 %v1882
    %1914 = vmatprep.subr.bf16.mxu0 0
    %1915 = vmatpush1.bf16.msra.mxu0 %v1883
    %1916 = vmatprep.subr.bf16.mxu0 0
    %1917 = vmatpush1.bf16.msra.mxu0 %v1884
    %1918 = vmatprep.subr.bf16.mxu0 0
    %1919 = vmatpush1.bf16.msra.mxu0 %v1885
    %1920 = vmatprep.subr.bf16.mxu0 0
    %1921 = vmatpush1.bf16.msra.mxu0 %v1886
    %1922 = vmatprep.subr.bf16.mxu0 0
    %1923 = vmatpush1.bf16.msra.mxu0 %v1887
    %1924 = vmatprep.subr.bf16.mxu0 0
    %1925 = vmatpush1.bf16.msra.mxu0 %v1888
    %1926 = vmatprep.subr.bf16.mxu0 0
    %1927 = vmatpush1.bf16.msra.mxu0 %v1889
    %1928 = vmatprep.subr.bf16.mxu0 0
    %1929 = vmatpush1.bf16.msra.mxu0 %v1890
    %1930 = vmatprep.subr.bf16.mxu0 0
    %1931 = vmatpush1.bf16.msra.mxu0 %v1891
    %1932 = vmatprep.subr.bf16.mxu0 0
    %1933 = vmatpush1.bf16.msra.mxu0 %v1908
    %1934 = vmatprep.subr.bf16.mxu0 0
    %1935 = vmatpush1.bf16.msra.mxu0 0
    %1936 = vmatprep.subr.bf16.mxu0 0
    %1937 = vmatpush1.bf16.msra.mxu0 0
    %1938 = vmatprep.subr.bf16.mxu0 0
    %1939 = vmatpush1.bf16.msra.mxu0 0
    %1940 = vmatprep.subr.bf16.mxu0 0
    %1941 = vmatpush1.bf16.msra.mxu0 0
    %1942 = vmatprep.mubr.bf16.mxu0 %v1905
    %1943 = vmatmul.mubr.bf16.gmra.mrb[0].mxu0 %v1803
    %v1944 = vpop.f32.mrb[0].mxu0
    %v1945 = vadd.f32 %v1833, %v1944
    %v1946 = vpop.f32.mrb[0].mxu0
    %v1947 = vpop.f32.mrb[0].mxu0
    %v1948 = vadd.f32 %v1833, %v1947
    %v1949 = vpop.f32.mrb[0].mxu0
    %1950 = vdwg.mxu0
    %1951 = vst [vmem:[#allocation2] sm:$0xff] %v1945
    %1952 = vst [vmem:[#allocation2 + $0x8] sm:$0xff] %v1948
    // Predicated region
    $region54: #{tpu_custom_call.1} parent=1 // pred_check
      _
    $region55: #{tpu_custom_call.1} parent=1 // pred_check_branch
      %1954 = sbr.rel (0) target = $region57
    $region56: #{tpu_custom_call.1} parent=1 // pred_region
      %s1956 = ssub.s32 256, 256
      %1957 = vsyncadd [#allocation3], %s1956
      %s1958 = sshll.u32 [#allocation2], 4
      %s1959 = int_to_ptr.vmem [resolvable:$true] %s1958
      %1964 = dma.vmem_to_hbm [thread:$0]  %s1959, 256, %s13, [#allocation3], 128, 128, 8
    $region57: #{tpu_custom_call.1} parent=1 // pred_fallthru
      _
    // Predicated region
    $region58: #{tpu_custom_call.1} parent=1 // pred_check
      _
    $region59: #{tpu_custom_call.1} parent=1 // pred_check_branch
      %1966 = sbr.rel (0) target = $region61
    $region60: #{tpu_custom_call.1} parent=1 // pred_region
      %1967 = dma.done [#allocation3], 256
    $region61: #{tpu_custom_call.1} parent=1 // pred_fallthru
      _
    %1968 = vsyncpa [#allocation3], 1

</llo_original>
